<compile_context>
chip_gen: v5e
topology: v5e:2x2
jax: 0.10.0
libtpu: 0.0.40
codegen_flags: <defaults>
</compile_context>

<pallas_src>
import numpy as np
import jax
import jax.numpy as jnp
from jax import lax
from jax.experimental import pallas as pl
from jax.experimental.pallas import tpu as pltpu


# ----------------------------------------------------------------------------
# Static helpers (numpy, evaluated at trace time -> zero runtime cost)
# ----------------------------------------------------------------------------
def _bilinear_matrix(n_in, n_out):
    """(n_out, n_in) matrix of torch Upsample(bilinear, align_corners=True)."""
    if n_in == 1:
        return np.ones((n_out, 1), np.float32)
    c = np.arange(n_out, dtype=np.float64) * (n_in - 1) / (n_out - 1)
    i0 = np.clip(np.floor(c).astype(np.int64), 0, n_in - 2)
    frac = (c - i0).astype(np.float32)
    m = np.zeros((n_out, n_in), np.float32)
    m[np.arange(n_out), i0] += 1.0 - frac
    m[np.arange(n_out), i0 + 1] += frac
    return m


# ----------------------------------------------------------------------------
# Pallas kernel: fused upsample + pad + concat + (conv3x3+BN+ReLU) x 2
# ----------------------------------------------------------------------------
def _make_up_doubleconv_kernel(C1, C2, Cmid, Cout, Wp, L, p0):
    Cin = C1 + C2

    def kernel(x1f_ref, x2pf_ref, upT_ref, mask_ref,
               w1_ref, b1_ref, w2_ref, b2_ref,
               out_ref, xc_ref, hp_ref, p1_ref, p2_ref):
        # ---- fused bilinear upsample + pad + channel concat ----------------
        # stage the flattened zero-padded frame for all Cin channels:
        # rows [0:C2) = x2 (already framed by the wrapper pad),
        # rows [C2:Cin) = upsampled + padded x1 via one placement matmul.
        xc_ref[0:C2, :] = x2pf_ref[0]
        x1_frame = jnp.dot(x1f_ref[0], upT_ref[...],
                           preferred_element_type=jnp.float32)
        xc_ref[C2:Cin, :] = x1_frame.astype(xc_ref.dtype)

        # ---- conv1: im2col (9 contiguous lane slices) + ONE MXU matmul -----
        for t in range(9):
            ky, kx = divmod(t, 3)
            off = ky * Wp + kx
            p1_ref[t * Cin:(t + 1) * Cin, :] = xc_ref[:, off:off + L]
        h1 = jnp.dot(w1_ref[...], p1_ref[...],
                     preferred_element_type=jnp.float32)
        h1 = jnp.maximum(h1 + b1_ref[...], 0.0)                    # (Cmid, L)

        # ---- re-embed h1 into a zero frame for conv2 (mask zeroes the junk
        #      border columns produced by computing conv1 frame-wide) --------
        hp_ref[...] = jnp.zeros(hp_ref.shape, hp_ref.dtype)
        hp_ref[:, p0:p0 + L] = (h1 * mask_ref[...]).astype(hp_ref.dtype)

        # ---- conv2: im2col + ONE MXU matmul --------------------------------
        for t in range(9):
            ky, kx = divmod(t, 3)
            off = ky * Wp + kx
            p2_ref[t * Cmid:(t + 1) * Cmid, :] = hp_ref[:, off:off + L]
        o = jnp.dot(w2_ref[...], p2_ref[...],
                    preferred_element_type=jnp.float32)
        o = jnp.maximum(o + b2_ref[...], 0.0)                      # (Cout, L)
        out_ref[0] = o.astype(out_ref.dtype)

    return kernel


def up_forward(x1, x2, kparams, compute_dtype=jnp.float32):
    """Forward of `up`. x1:(N,C1,Hi,Wi), x2:(N,C2,H,W), NCHW f32 -> NCHW f32."""
    w1m, b1, w2m, b2 = kparams
    N, C1, Hi, Wi = x1.shape
    _, C2, H, W = x2.shape
    Cin = C1 + C2
    Cmid = w1m.shape[0]
    Cout = w2m.shape[0]
    Ho, Wo = 2 * Hi, 2 * Wi
    padT = (H - Ho) // 2
    padL = (W - Wo) // 2

    # frame geometry: 1 halo row/col around the HxW image plus one extra bottom
    # row so every 3x3 tap is a contiguous, in-bounds lane slice.
    Wp = W + 2
    Hp = H + 3
    PF = Hp * Wp           # flattened frame length
    L = H * Wp             # lane width of the computed output slab (lane-dense)
    p0 = Wp + 1            # flat offset of image pixel (0, 0) inside the frame

    # static upsample(+diff-pad +halo-pad) placement matrix  (Hi*Wi, PF)
    ah = _bilinear_matrix(Hi, Ho)
    aw = _bilinear_matrix(Wi, Wo)
    ahf = np.zeros((Hp, Hi), np.float32)
    ahf[1 + padT:1 + padT + Ho, :] = ah
    awf = np.zeros((Wp, Wi), np.float32)
    awf[1 + padL:1 + padL + Wo, :] = aw
    up_t = np.kron(ahf, awf).T

    # interior-column mask used when re-embedding conv1's output into a frame
    cols = (np.arange(L) + p0) % Wp
    mask = ((cols >= 1) & (cols <= W)).astype(np.float32)[None, :]   # (1, L)

    x1f = x1.reshape(N, C1, Hi * Wi).astype(compute_dtype)
    x2pf = jnp.pad(x2, ((0, 0), (0, 0), (1, Hp - H - 1), (1, Wp - W - 1)))
    x2pf = x2pf.reshape(N, C2, PF).astype(compute_dtype)
    up_t = jnp.asarray(up_t, compute_dtype)
    mask = jnp.asarray(mask, jnp.float32)
    w1m = w1m.astype(compute_dtype)
    w2m = w2m.astype(compute_dtype)

    kernel = _make_up_doubleconv_kernel(C1, C2, Cmid, Cout, Wp, L, p0)

    out_flat = pl.pallas_call(
        kernel,
        out_shape=jax.ShapeDtypeStruct((N, Cout, L), jnp.float32),
        grid=(N,),
        in_specs=[
            pl.BlockSpec((1, C1, Hi * Wi), lambda n: (n, 0, 0)),   # x1 (flat)
            pl.BlockSpec((1, C2, PF), lambda n: (n, 0, 0)),        # x2 (frame)
            pl.BlockSpec((Hi * Wi, PF), lambda n: (0, 0)),         # upsample mat
            pl.BlockSpec((1, L), lambda n: (0, 0)),                # column mask
            pl.BlockSpec((Cmid, 9 * Cin), lambda n: (0, 0)),       # conv1 w (BN-folded)
            pl.BlockSpec((Cmid, 1), lambda n: (0, 0)),             # conv1 bias
            pl.BlockSpec((Cout, 9 * Cmid), lambda n: (0, 0)),      # conv2 w (BN-folded)
            pl.BlockSpec((Cout, 1), lambda n: (0, 0)),             # conv2 bias
        ],
        out_specs=pl.BlockSpec((1, Cout, L), lambda n: (n, 0, 0)),
        scratch_shapes=[
            pltpu.VMEM((Cin, PF), compute_dtype),      # staged concat frame
            pltpu.VMEM((Cmid, PF), compute_dtype),     # h1 re-embedded frame
            pltpu.VMEM((9 * Cin, L), compute_dtype),   # conv1 im2col patches
            pltpu.VMEM((9 * Cmid, L), compute_dtype),  # conv2 im2col patches
        ],
        compiler_params=pltpu.CompilerParams(
            dimension_semantics=("parallel",),          # batch -> v7x dual TC
            vmem_limit_bytes=32 * 1024 * 1024),
    )(x1f, x2pf, up_t, mask, w1m, b1, w2m, b2)

    # (N, Cout, H*Wp) -> (N, Cout, H, W): drop the junk frame columns.
    return out_flat.reshape(N, Cout, H, Wp)[:, :, :, :W]


# ----------------------------------------------------------------------------
# Parameters (PyTorch layouts) and folding into kernel layout
# ----------------------------------------------------------------------------
def make_params(key, in_ch, out_ch):
    def conv_bn(k, cin, cout):
        kw, kb, kg, kbe, km, kv = jax.random.split(k, 6)
        return dict(
            w=0.1 * jax.random.normal(kw, (cout, cin, 3, 3), jnp.float32),  # OIHW
            b=0.1 * jax.random.normal(kb, (cout,), jnp.float32),
            gamma=1.0 + 0.1 * jax.random.normal(kg, (cout,), jnp.float32),
            beta=0.1 * jax.random.normal(kbe, (cout,), jnp.float32),
            mean=0.05 * jax.random.normal(km, (cout,), jnp.float32),
            var=0.9 + 0.1 * jnp.abs(jax.random.normal(kv, (cout,), jnp.float32)),
        )
    k1, k2 = jax.random.split(key)
    return conv_bn(k1, in_ch, out_ch), conv_bn(k2, out_ch, out_ch)


def fold_conv_bn(p, eps=1e-5):
    """PyTorch OIHW conv + BN running stats -> BN-scale-folded (Cout, 9*Cin)
    matmul weight and per-channel bias column (columns ordered (ky, kx, ci))."""
    cout, cin = p["w"].shape[:2]
    scale = p["gamma"] / jnp.sqrt(p["var"] + eps)                     # (cout,)
    w_mat = jnp.transpose(p["w"], (0, 2, 3, 1)).reshape(cout, 9 * cin)
    w_mat = w_mat * scale[:, None]                                    # fold BN scale
    bias = (p["b"] - p["mean"]) * scale + p["beta"]
    return w_mat, bias.reshape(cout, 1)


# ----------------------------------------------------------------------------
# Pure-JAX reference (for a numerical sanity check)
# ----------------------------------------------------------------------------
def up_reference(x1, x2, p_conv1, p_conv2, eps=1e-5):
    def upsample2x(x):
        n, c, h, w = x.shape
        ho, wo = 2 * h, 2 * w

        def coords(n_in, n_out):
            cc = jnp.arange(n_out, dtype=jnp.float32) * (n_in - 1) / max(n_out - 1, 1)
            i0 = jnp.clip(jnp.floor(cc).astype(jnp.int32), 0, max(n_in - 2, 0))
            return i0, cc - i0.astype(jnp.float32)

        iy, fy = coords(h, ho)
        ix, fx = coords(w, wo)
        a = jnp.take(x, iy, axis=2)
        b = jnp.take(x, jnp.minimum(iy + 1, h - 1), axis=2)
        xr = a * (1 - fy)[None, None, :, None] + b * fy[None, None, :, None]
        a = jnp.take(xr, ix, axis=3)
        b = jnp.take(xr, jnp.minimum(ix + 1, w - 1), axis=3)
        return a * (1 - fx)[None, None, None, :] + b * fx[None, None, None, :]

    def conv_bn_relu(x, p):
        y = lax.conv_general_dilated(x, p["w"], (1, 1), ((1, 1), (1, 1)),
                                     dimension_numbers=("NCHW", "OIHW", "NCHW"))
        y = y + p["b"][None, :, None, None]
        y = (y - p["mean"][None, :, None, None]) * (
            p["gamma"] / jnp.sqrt(p["var"] + eps))[None, :, None, None] \
            + p["beta"][None, :, None, None]
        return jnp.maximum(y, 0.0)

    x1u = upsample2x(x1)
    dy = x2.shape[2] - x1u.shape[2]
    dx = x2.shape[3] - x1u.shape[3]
    x1p = jnp.pad(x1u, ((0, 0), (0, 0),
                        (dy // 2, dy - dy // 2), (dx // 2, dx - dx // 2)))
    x = jnp.concatenate([x2, x1p], axis=1)
    return conv_bn_relu(conv_bn_relu(x, p_conv1), p_conv2)


if __name__ == "__main__":
    key = jax.random.PRNGKey(0)
    k1, k2, kp = jax.random.split(key, 3)

    in_ch, out_ch = 8, 4            # up(in_ch=8, out_ch=4, bilinear=True)
    N, H, W = 2, 16, 16
    # x1: deeper level (in_ch//2 channels, half spatial); x2: skip connection
    x1 = jax.random.normal(k1, (N, in_ch // 2, H // 2, W // 2), jnp.float32)
    x2 = jax.random.normal(k2, (N, in_ch // 2, H, W), jnp.float32)

    p_conv1, p_conv2 = make_params(kp, in_ch, out_ch)
    kparams = fold_conv_bn(p_conv1) + fold_conv_bn(p_conv2)

    out = jax.jit(up_forward)(x1, x2, kparams)
    jax.block_until_ready(out)

    assert out.shape == (N, out_ch, H, W), out.shape
    assert bool(jnp.all(jnp.isfinite(out)))

    ref = up_reference(x1, x2, p_conv1, p_conv2)
    assert float(jnp.max(jnp.abs(out - ref))) < 1e-1

    print("KERNEL_OK")
</pallas_src>

<mosaic_0001>
module attributes {stable_mosaic.version = 11 : i64} {
  func.func @kernel(%arg0: i32, %arg1: memref<1x4x64xf32, #tpu.memory_space<vmem>>, %arg2: memref<1x4x342xf32, #tpu.memory_space<vmem>>, %arg3: memref<64x342xf32, #tpu.memory_space<vmem>>, %arg4: memref<1x288xf32, #tpu.memory_space<vmem>>, %arg5: memref<4x72xf32, #tpu.memory_space<vmem>>, %arg6: memref<4x1xf32, #tpu.memory_space<vmem>>, %arg7: memref<4x36xf32, #tpu.memory_space<vmem>>, %arg8: memref<4x1xf32, #tpu.memory_space<vmem>>, %arg9: memref<1x4x288xf32, #tpu.memory_space<vmem>>, %arg10: memref<8x342xf32, #tpu.memory_space<vmem>>, %arg11: memref<4x342xf32, #tpu.memory_space<vmem>>, %arg12: memref<72x288xf32, #tpu.memory_space<vmem>>, %arg13: memref<36x288xf32, #tpu.memory_space<vmem>>) attributes {dimension_semantics = [#tpu.dimension_semantics<parallel>], iteration_bounds = array<i64: 2>, scalar_prefetch = 0 : i64, scratch_operands = 4 : i64, tpu.core_type = #tpu.core_type<tc>, window_params = [{transform_indices = @transform_0, window_bounds = array<i64: 1, 4, 64>}, {transform_indices = @transform_1, window_bounds = array<i64: 1, 4, 342>}, {pipeline_mode = #tpu.pipeline_mode<synchronous>, transform_indices = @transform_2, window_bounds = array<i64: 64, 342>}, {pipeline_mode = #tpu.pipeline_mode<synchronous>, transform_indices = @transform_3, window_bounds = array<i64: 1, 288>}, {pipeline_mode = #tpu.pipeline_mode<synchronous>, transform_indices = @transform_4, window_bounds = array<i64: 4, 72>}, {pipeline_mode = #tpu.pipeline_mode<synchronous>, transform_indices = @transform_5, window_bounds = array<i64: 4, 1>}, {pipeline_mode = #tpu.pipeline_mode<synchronous>, transform_indices = @transform_6, window_bounds = array<i64: 4, 36>}, {pipeline_mode = #tpu.pipeline_mode<synchronous>, transform_indices = @transform_7, window_bounds = array<i64: 4, 1>}, {transform_indices = @transform_8, window_bounds = array<i64: 1, 4, 288>}]} {
    %c0 = arith.constant 0 : index
    %c0_0 = arith.constant 0 : index
    %c0_1 = arith.constant 0 : index
    %0 = vector.load %arg2[%c0, %c0_0, %c0_1] : memref<1x4x342xf32, #tpu.memory_space<vmem>>, vector<1x4x342xf32>
    %1 = vector.shape_cast %0 : vector<1x4x342xf32> to vector<4x342xf32>
    %c0_2 = arith.constant 0 : index
    %c0_3 = arith.constant 0 : index
    %2 = vector.load %arg10[%c0_2, %c0_3] : memref<8x342xf32, #tpu.memory_space<vmem>>, vector<4x342xf32>
    tpu.vector_store %arg10[%c0_2, %c0_3], %1 {strides = array<i32>} : memref<8x342xf32, #tpu.memory_space<vmem>>, vector<4x342xf32>,
    %c0_4 = arith.constant 0 : index
    %c0_5 = arith.constant 0 : index
    %c0_6 = arith.constant 0 : index
    %3 = vector.load %arg1[%c0_4, %c0_5, %c0_6] : memref<1x4x64xf32, #tpu.memory_space<vmem>>, vector<1x4x64xf32>
    %4 = vector.shape_cast %3 : vector<1x4x64xf32> to vector<4x64xf32>
    %c0_7 = arith.constant 0 : index
    %c0_8 = arith.constant 0 : index
    %5 = vector.load %arg3[%c0_7, %c0_8] : memref<64x342xf32, #tpu.memory_space<vmem>>, vector<64x342xf32>
    %cst = arith.constant dense<0.000000e+00> : vector<4x342xf32>
    %6 = tpu.matmul %4, %5, %cst {dimension_numbers = #tpu.dot_dimension_numbers<[1], [0], [0], [1], [0, 0, 1, 1], [], []>} : vector<4x64xf32>, vector<64x342xf32>, vector<4x342xf32> -> vector<4x342xf32>
    %c4 = arith.constant 4 : index
    %c0_9 = arith.constant 0 : index
    %7 = vector.load %arg10[%c4, %c0_9] : memref<8x342xf32, #tpu.memory_space<vmem>>, vector<4x342xf32>
    tpu.vector_store %arg10[%c4, %c0_9], %6 {strides = array<i32>} : memref<8x342xf32, #tpu.memory_space<vmem>>, vector<4x342xf32>,
    %c0_10 = arith.constant 0 : index
    %c0_11 = arith.constant 0 : index
    %8 = vector.load %arg10[%c0_10, %c0_11] : memref<8x342xf32, #tpu.memory_space<vmem>>, vector<8x288xf32>
    %c0_12 = arith.constant 0 : index
    %c0_13 = arith.constant 0 : index
    %9 = vector.load %arg12[%c0_12, %c0_13] : memref<72x288xf32, #tpu.memory_space<vmem>>, vector<8x288xf32>
    tpu.vector_store %arg12[%c0_12, %c0_13], %8 {strides = array<i32>} : memref<72x288xf32, #tpu.memory_space<vmem>>, vector<8x288xf32>,
    %c0_14 = arith.constant 0 : index
    %c1 = arith.constant 1 : index
    %10 = vector.load %arg10[%c0_14, %c1] : memref<8x342xf32, #tpu.memory_space<vmem>>, vector<8x288xf32>
    %c8 = arith.constant 8 : index
    %c0_15 = arith.constant 0 : index
    %11 = vector.load %arg12[%c8, %c0_15] : memref<72x288xf32, #tpu.memory_space<vmem>>, vector<8x288xf32>
    tpu.vector_store %arg12[%c8, %c0_15], %10 {strides = array<i32>} : memref<72x288xf32, #tpu.memory_space<vmem>>, vector<8x288xf32>,
    %c0_16 = arith.constant 0 : index
    %c2 = arith.constant 2 : index
    %12 = vector.load %arg10[%c0_16, %c2] : memref<8x342xf32, #tpu.memory_space<vmem>>, vector<8x288xf32>
    %c16 = arith.constant 16 : index
    %c0_17 = arith.constant 0 : index
    %13 = vector.load %arg12[%c16, %c0_17] : memref<72x288xf32, #tpu.memory_space<vmem>>, vector<8x288xf32>
    tpu.vector_store %arg12[%c16, %c0_17], %12 {strides = array<i32>} : memref<72x288xf32, #tpu.memory_space<vmem>>, vector<8x288xf32>,
    %c0_18 = arith.constant 0 : index
    %c18 = arith.constant 18 : index
    %14 = vector.load %arg10[%c0_18, %c18] : memref<8x342xf32, #tpu.memory_space<vmem>>, vector<8x288xf32>
    %c24 = arith.constant 24 : index
    %c0_19 = arith.constant 0 : index
    %15 = vector.load %arg12[%c24, %c0_19] : memref<72x288xf32, #tpu.memory_space<vmem>>, vector<8x288xf32>
    tpu.vector_store %arg12[%c24, %c0_19], %14 {strides = array<i32>} : memref<72x288xf32, #tpu.memory_space<vmem>>, vector<8x288xf32>,
    %c0_20 = arith.constant 0 : index
    %c19 = arith.constant 19 : index
    %16 = vector.load %arg10[%c0_20, %c19] : memref<8x342xf32, #tpu.memory_space<vmem>>, vector<8x288xf32>
    %c32 = arith.constant 32 : index
    %c0_21 = arith.constant 0 : index
    %17 = vector.load %arg12[%c32, %c0_21] : memref<72x288xf32, #tpu.memory_space<vmem>>, vector<8x288xf32>
    tpu.vector_store %arg12[%c32, %c0_21], %16 {strides = array<i32>} : memref<72x288xf32, #tpu.memory_space<vmem>>, vector<8x288xf32>,
    %c0_22 = arith.constant 0 : index
    %c20 = arith.constant 20 : index
    %18 = vector.load %arg10[%c0_22, %c20] : memref<8x342xf32, #tpu.memory_space<vmem>>, vector<8x288xf32>
    %c40 = arith.constant 40 : index
    %c0_23 = arith.constant 0 : index
    %19 = vector.load %arg12[%c40, %c0_23] : memref<72x288xf32, #tpu.memory_space<vmem>>, vector<8x288xf32>
    tpu.vector_store %arg12[%c40, %c0_23], %18 {strides = array<i32>} : memref<72x288xf32, #tpu.memory_space<vmem>>, vector<8x288xf32>,
    %c0_24 = arith.constant 0 : index
    %c36 = arith.constant 36 : index
    %20 = vector.load %arg10[%c0_24, %c36] : memref<8x342xf32, #tpu.memory_space<vmem>>, vector<8x288xf32>
    %c48 = arith.constant 48 : index
    %c0_25 = arith.constant 0 : index
    %21 = vector.load %arg12[%c48, %c0_25] : memref<72x288xf32, #tpu.memory_space<vmem>>, vector<8x288xf32>
    tpu.vector_store %arg12[%c48, %c0_25], %20 {strides = array<i32>} : memref<72x288xf32, #tpu.memory_space<vmem>>, vector<8x288xf32>,
    %c0_26 = arith.constant 0 : index
    %c37 = arith.constant 37 : index
    %22 = vector.load %arg10[%c0_26, %c37] : memref<8x342xf32, #tpu.memory_space<vmem>>, vector<8x288xf32>
    %c56 = arith.constant 56 : index
    %c0_27 = arith.constant 0 : index
    %23 = vector.load %arg12[%c56, %c0_27] : memref<72x288xf32, #tpu.memory_space<vmem>>, vector<8x288xf32>
    tpu.vector_store %arg12[%c56, %c0_27], %22 {strides = array<i32>} : memref<72x288xf32, #tpu.memory_space<vmem>>, vector<8x288xf32>,
    %c0_28 = arith.constant 0 : index
    %c38 = arith.constant 38 : index
    %24 = vector.load %arg10[%c0_28, %c38] : memref<8x342xf32, #tpu.memory_space<vmem>>, vector<8x288xf32>
    %c64 = arith.constant 64 : index
    %c0_29 = arith.constant 0 : index
    %25 = vector.load %arg12[%c64, %c0_29] : memref<72x288xf32, #tpu.memory_space<vmem>>, vector<8x288xf32>
    tpu.vector_store %arg12[%c64, %c0_29], %24 {strides = array<i32>} : memref<72x288xf32, #tpu.memory_space<vmem>>, vector<8x288xf32>,
    %c0_30 = arith.constant 0 : index
    %c0_31 = arith.constant 0 : index
    %26 = vector.load %arg5[%c0_30, %c0_31] : memref<4x72xf32, #tpu.memory_space<vmem>>, vector<4x72xf32>
    %c0_32 = arith.constant 0 : index
    %c0_33 = arith.constant 0 : index
    %27 = vector.load %arg12[%c0_32, %c0_33] : memref<72x288xf32, #tpu.memory_space<vmem>>, vector<72x288xf32>
    %cst_34 = arith.constant dense<0.000000e+00> : vector<4x288xf32>
    %28 = tpu.matmul %26, %27, %cst_34 {dimension_numbers = #tpu.dot_dimension_numbers<[1], [0], [0], [1], [0, 0, 1, 1], [], []>} : vector<4x72xf32>, vector<72x288xf32>, vector<4x288xf32> -> vector<4x288xf32>
    %c0_35 = arith.constant 0 : index
    %c0_36 = arith.constant 0 : index
    %29 = vector.load %arg6[%c0_35, %c0_36] : memref<4x1xf32, #tpu.memory_space<vmem>>, vector<4x1xf32>
    %30 = vector.broadcast %29 : vector<4x1xf32> to vector<4x288xf32>
    %31 = arith.addf %28, %30 : vector<4x288xf32>
    %cst_37 = arith.constant 0.000000e+00 : f32
    %32 = vector.broadcast %cst_37 : f32 to vector<4x288xf32>
    %33 = arith.maximumf %31, %32 : vector<4x288xf32>
    %cst_38 = arith.constant 0.000000e+00 : f32
    %34 = vector.broadcast %cst_38 : f32 to vector<4x342xf32>
    %c0_39 = arith.constant 0 : index
    %c0_40 = arith.constant 0 : index
    %35 = vector.load %arg11[%c0_39, %c0_40] : memref<4x342xf32, #tpu.memory_space<vmem>>, vector<4x342xf32>
    tpu.vector_store %arg11[%c0_39, %c0_40], %34 {strides = array<i32>} : memref<4x342xf32, #tpu.memory_space<vmem>>, vector<4x342xf32>,
    %c0_41 = arith.constant 0 : index
    %c0_42 = arith.constant 0 : index
    %36 = vector.load %arg4[%c0_41, %c0_42] : memref<1x288xf32, #tpu.memory_space<vmem>>, vector<1x288xf32>
    %37 = vector.broadcast %36 : vector<1x288xf32> to vector<4x288xf32>
    %38 = arith.mulf %33, %37 : vector<4x288xf32>
    %c0_43 = arith.constant 0 : index
    %c19_44 = arith.constant 19 : index
    %39 = vector.load %arg11[%c0_43, %c19_44] : memref<4x342xf32, #tpu.memory_space<vmem>>, vector<4x288xf32>
    tpu.vector_store %arg11[%c0_43, %c19_44], %38 {strides = array<i32>} : memref<4x342xf32, #tpu.memory_space<vmem>>, vector<4x288xf32>,
    %c0_45 = arith.constant 0 : index
    %c0_46 = arith.constant 0 : index
    %40 = vector.load %arg11[%c0_45, %c0_46] : memref<4x342xf32, #tpu.memory_space<vmem>>, vector<4x288xf32>
    %c0_47 = arith.constant 0 : index
    %c0_48 = arith.constant 0 : index
    %41 = vector.load %arg13[%c0_47, %c0_48] : memref<36x288xf32, #tpu.memory_space<vmem>>, vector<4x288xf32>
    tpu.vector_store %arg13[%c0_47, %c0_48], %40 {strides = array<i32>} : memref<36x288xf32, #tpu.memory_space<vmem>>, vector<4x288xf32>,
    %c0_49 = arith.constant 0 : index
    %c1_50 = arith.constant 1 : index
    %42 = vector.load %arg11[%c0_49, %c1_50] : memref<4x342xf32, #tpu.memory_space<vmem>>, vector<4x288xf32>
    %c4_51 = arith.constant 4 : index
    %c0_52 = arith.constant 0 : index
    %43 = vector.load %arg13[%c4_51, %c0_52] : memref<36x288xf32, #tpu.memory_space<vmem>>, vector<4x288xf32>
    tpu.vector_store %arg13[%c4_51, %c0_52], %42 {strides = array<i32>} : memref<36x288xf32, #tpu.memory_space<vmem>>, vector<4x288xf32>,
    %c0_53 = arith.constant 0 : index
    %c2_54 = arith.constant 2 : index
    %44 = vector.load %arg11[%c0_53, %c2_54] : memref<4x342xf32, #tpu.memory_space<vmem>>, vector<4x288xf32>
    %c8_55 = arith.constant 8 : index
    %c0_56 = arith.constant 0 : index
    %45 = vector.load %arg13[%c8_55, %c0_56] : memref<36x288xf32, #tpu.memory_space<vmem>>, vector<4x288xf32>
    tpu.vector_store %arg13[%c8_55, %c0_56], %44 {strides = array<i32>} : memref<36x288xf32, #tpu.memory_space<vmem>>, vector<4x288xf32>,
    %c0_57 = arith.constant 0 : index
    %c18_58 = arith.constant 18 : index
    %46 = vector.load %arg11[%c0_57, %c18_58] : memref<4x342xf32, #tpu.memory_space<vmem>>, vector<4x288xf32>
    %c12 = arith.constant 12 : index
    %c0_59 = arith.constant 0 : index
    %47 = vector.load %arg13[%c12, %c0_59] : memref<36x288xf32, #tpu.memory_space<vmem>>, vector<4x288xf32>
    tpu.vector_store %arg13[%c12, %c0_59], %46 {strides = array<i32>} : memref<36x288xf32, #tpu.memory_space<vmem>>, vector<4x288xf32>,
    %c0_60 = arith.constant 0 : index
    %c19_61 = arith.constant 19 : index
    %48 = vector.load %arg11[%c0_60, %c19_61] : memref<4x342xf32, #tpu.memory_space<vmem>>, vector<4x288xf32>
    %c16_62 = arith.constant 16 : index
    %c0_63 = arith.constant 0 : index
    %49 = vector.load %arg13[%c16_62, %c0_63] : memref<36x288xf32, #tpu.memory_space<vmem>>, vector<4x288xf32>
    tpu.vector_store %arg13[%c16_62, %c0_63], %48 {strides = array<i32>} : memref<36x288xf32, #tpu.memory_space<vmem>>, vector<4x288xf32>,
    %c0_64 = arith.constant 0 : index
    %c20_65 = arith.constant 20 : index
    %50 = vector.load %arg11[%c0_64, %c20_65] : memref<4x342xf32, #tpu.memory_space<vmem>>, vector<4x288xf32>
    %c20_66 = arith.constant 20 : index
    %c0_67 = arith.constant 0 : index
    %51 = vector.load %arg13[%c20_66, %c0_67] : memref<36x288xf32, #tpu.memory_space<vmem>>, vector<4x288xf32>
    tpu.vector_store %arg13[%c20_66, %c0_67], %50 {strides = array<i32>} : memref<36x288xf32, #tpu.memory_space<vmem>>, vector<4x288xf32>,
    %c0_68 = arith.constant 0 : index
    %c36_69 = arith.constant 36 : index
    %52 = vector.load %arg11[%c0_68, %c36_69] : memref<4x342xf32, #tpu.memory_space<vmem>>, vector<4x288xf32>
    %c24_70 = arith.constant 24 : index
    %c0_71 = arith.constant 0 : index
    %53 = vector.load %arg13[%c24_70, %c0_71] : memref<36x288xf32, #tpu.memory_space<vmem>>, vector<4x288xf32>
    tpu.vector_store %arg13[%c24_70, %c0_71], %52 {strides = array<i32>} : memref<36x288xf32, #tpu.memory_space<vmem>>, vector<4x288xf32>,
    %c0_72 = arith.constant 0 : index
    %c37_73 = arith.constant 37 : index
    %54 = vector.load %arg11[%c0_72, %c37_73] : memref<4x342xf32, #tpu.memory_space<vmem>>, vector<4x288xf32>
    %c28 = arith.constant 28 : index
    %c0_74 = arith.constant 0 : index
    %55 = vector.load %arg13[%c28, %c0_74] : memref<36x288xf32, #tpu.memory_space<vmem>>, vector<4x288xf32>
    tpu.vector_store %arg13[%c28, %c0_74], %54 {strides = array<i32>} : memref<36x288xf32, #tpu.memory_space<vmem>>, vector<4x288xf32>,
    %c0_75 = arith.constant 0 : index
    %c38_76 = arith.constant 38 : index
    %56 = vector.load %arg11[%c0_75, %c38_76] : memref<4x342xf32, #tpu.memory_space<vmem>>, vector<4x288xf32>
    %c32_77 = arith.constant 32 : index
    %c0_78 = arith.constant 0 : index
    %57 = vector.load %arg13[%c32_77, %c0_78] : memref<36x288xf32, #tpu.memory_space<vmem>>, vector<4x288xf32>
    tpu.vector_store %arg13[%c32_77, %c0_78], %56 {strides = array<i32>} : memref<36x288xf32, #tpu.memory_space<vmem>>, vector<4x288xf32>,
    %c0_79 = arith.constant 0 : index
    %c0_80 = arith.constant 0 : index
    %58 = vector.load %arg7[%c0_79, %c0_80] : memref<4x36xf32, #tpu.memory_space<vmem>>, vector<4x36xf32>
    %c0_81 = arith.constant 0 : index
    %c0_82 = arith.constant 0 : index
    %59 = vector.load %arg13[%c0_81, %c0_82] : memref<36x288xf32, #tpu.memory_space<vmem>>, vector<36x288xf32>
    %cst_83 = arith.constant dense<0.000000e+00> : vector<4x288xf32>
    %60 = tpu.matmul %58, %59, %cst_83 {dimension_numbers = #tpu.dot_dimension_numbers<[1], [0], [0], [1], [0, 0, 1, 1], [], []>} : vector<4x36xf32>, vector<36x288xf32>, vector<4x288xf32> -> vector<4x288xf32>
    %c0_84 = arith.constant 0 : index
    %c0_85 = arith.constant 0 : index
    %61 = vector.load %arg8[%c0_84, %c0_85] : memref<4x1xf32, #tpu.memory_space<vmem>>, vector<4x1xf32>
    %62 = vector.broadcast %61 : vector<4x1xf32> to vector<4x288xf32>
    %63 = arith.addf %60, %62 : vector<4x288xf32>
    %cst_86 = arith.constant 0.000000e+00 : f32
    %64 = vector.broadcast %cst_86 : f32 to vector<4x288xf32>
    %65 = arith.maximumf %63, %64 : vector<4x288xf32>
    %c0_87 = arith.constant 0 : index
    %c0_88 = arith.constant 0 : index
    %c0_89 = arith.constant 0 : index
    %66 = vector.load %arg9[%c0_87, %c0_88, %c0_89] : memref<1x4x288xf32, #tpu.memory_space<vmem>>, vector<1x4x288xf32>
    %67 = vector.shape_cast %66 : vector<1x4x288xf32> to vector<4x288xf32>
    %68 = vector.shape_cast %65 : vector<4x288xf32> to vector<1x4x288xf32>
    tpu.vector_store %arg9[%c0_87, %c0_88, %c0_89], %68 {strides = array<i32>} : memref<1x4x288xf32, #tpu.memory_space<vmem>>, vector<1x4x288xf32>,
    return
  }
  func.func @transform_0(%arg0: i32) -> (i32, i32, i32) {
    %c0_i32 = arith.constant 0 : i32
    %c0_i32_0 = arith.constant 0 : i32
    %c0_i32_1 = arith.constant 0 : i32
    return %arg0, %c0_i32, %c0_i32_0 : i32, i32, i32
  }
  func.func @transform_1(%arg0: i32) -> (i32, i32, i32) {
    %c0_i32 = arith.constant 0 : i32
    %c0_i32_0 = arith.constant 0 : i32
    %c0_i32_1 = arith.constant 0 : i32
    return %arg0, %c0_i32, %c0_i32_0 : i32, i32, i32
  }
  func.func @transform_2(%arg0: i32) -> (i32, i32) {
    %c0_i32 = arith.constant 0 : i32
    %c0_i32_0 = arith.constant 0 : i32
    %c0_i32_1 = arith.constant 0 : i32
    return %c0_i32, %c0_i32_0 : i32, i32
  }
  func.func @transform_3(%arg0: i32) -> (i32, i32) {
    %c0_i32 = arith.constant 0 : i32
    %c0_i32_0 = arith.constant 0 : i32
    %c0_i32_1 = arith.constant 0 : i32
    return %c0_i32, %c0_i32_0 : i32, i32
  }
  func.func @transform_4(%arg0: i32) -> (i32, i32) {
    %c0_i32 = arith.constant 0 : i32
    %c0_i32_0 = arith.constant 0 : i32
    %c0_i32_1 = arith.constant 0 : i32
    return %c0_i32, %c0_i32_0 : i32, i32
  }
  func.func @transform_5(%arg0: i32) -> (i32, i32) {
    %c0_i32 = arith.constant 0 : i32
    %c0_i32_0 = arith.constant 0 : i32
    %c0_i32_1 = arith.constant 0 : i32
    return %c0_i32, %c0_i32_0 : i32, i32
  }
  func.func @transform_6(%arg0: i32) -> (i32, i32) {
    %c0_i32 = arith.constant 0 : i32
    %c0_i32_0 = arith.constant 0 : i32
    %c0_i32_1 = arith.constant 0 : i32
    return %c0_i32, %c0_i32_0 : i32, i32
  }
  func.func @transform_7(%arg0: i32) -> (i32, i32) {
    %c0_i32 = arith.constant 0 : i32
    %c0_i32_0 = arith.constant 0 : i32
    %c0_i32_1 = arith.constant 0 : i32
    return %c0_i32, %c0_i32_0 : i32, i32
  }
  func.func @transform_8(%arg0: i32) -> (i32, i32, i32) {
    %c0_i32 = arith.constant 0 : i32
    %c0_i32_0 = arith.constant 0 : i32
    %c0_i32_1 = arith.constant 0 : i32
    return %arg0, %c0_i32, %c0_i32_0 : i32, i32, i32
  }
}

</mosaic_0001>

<llo_original>
// kernel: up_forward.1
$region0: #{up_forward.1}
  #allocation0 [shape = 'u32[]', space=smem, size = 0x4, offset = 0x4, fixed_abs, tag = 'smem constant byte address 0x4 - core index']
  #allocation1 [shape = 'u32[72,128]{1,0:T(1,128)}', space=vmem, size = 0x9000, scoped, tag = 'internal scratch']
  #allocation2 [shape = 'f32[8,342]{1,0:T(8,128)}', space=vmem, size = 0x3000, scoped, tag = 'scratch operand']
  #allocation3 [shape = 'f32[4,342]{1,0:T(4,128)}', space=vmem, size = 0x1800, scoped, tag = 'scratch operand']
  #allocation4 [shape = 'f32[72,288]{1,0:T(8,128)}', space=vmem, size = 0x1b000, scoped, tag = 'scratch operand']
  #allocation5 [shape = 'f32[36,288]{1,0:T(8,128)}', space=vmem, size = 0xf000, scoped, tag = 'scratch operand']
  %s0 = inlined_call_operand.vmem [shape: f32[2,4,64], index: 0, kind: input, shape index: {}]
  %s1 = inlined_call_operand.vmem [shape: f32[2,4,342], index: 1, kind: input, shape index: {}]
  %s2 = inlined_call_operand.vmem [shape: f32[64,342], index: 2, kind: input, shape index: {}]
  %s3 = inlined_call_operand.vmem [shape: f32[1,288], index: 3, kind: input, shape index: {}]
  %s4 = inlined_call_operand.vmem [shape: f32[4,72], index: 4, kind: input, shape index: {}]
  %s5 = inlined_call_operand.vmem [shape: f32[4,1], index: 5, kind: input, shape index: {}]
  %s6 = inlined_call_operand.vmem [shape: f32[4,36], index: 6, kind: input, shape index: {}]
  %s7 = inlined_call_operand.vmem [shape: f32[4,1], index: 7, kind: input, shape index: {}]
  %s8 = inlined_call_operand.vmem [shape: f32[2,4,288], index: 8, kind: output, shape index: {}]
  %s9 = sld [smem:[#allocation0]]
  $region65: #{up_forward.1} parent=0
    _
  %s11 = ssub.s32 1, %s9
  %s12 = scalar_select 0, %s11, %s9
  loop: start=0, step=1, limit=4
  $region2: #{up_forward.1} parent=0 // loop_pre_header
    _
  $region3: #{up_forward.1} parent=0 // loop_header
    %s14 = sphi 0, %s18
    %p15 = scmp.ge.s32.totalorder %s14, 4
    %s24 = sphi 0, %s26
    %s27 = sphi 0, %s24
    %s28 = sphi 0, %s27
    %s44 = sphi 0, %s28
    %s50 = sphi 0, %s52
    %s53 = sphi 0, %s50
    %s54 = sphi 0, %s53
    %s70 = sphi 0, %s54
    %s74 = sphi 0, %s74
    %s76 = sphi 0, %s74
    %s77 = sphi 0, %s76
    %s91 = sphi 0, %s77
    %s95 = sphi 0, %s95
    %s97 = sphi 0, %s95
    %s98 = sphi 0, %s97
    %s112 = sphi 0, %s98
    %s116 = sphi 0, %s116
    %s118 = sphi 0, %s116
    %s119 = sphi 0, %s118
    %s133 = sphi 0, %s119
    %s137 = sphi 0, %s137
    %s139 = sphi 0, %s137
    %s140 = sphi 0, %s139
    %s154 = sphi 0, %s140
    %s158 = sphi 0, %s158
    %s160 = sphi 0, %s158
    %s161 = sphi 0, %s160
    %s175 = sphi 0, %s161
    %s179 = sphi 0, %s179
    %s181 = sphi 0, %s179
    %s182 = sphi 0, %s181
    %s196 = sphi 0, %s182
    %s202 = sphi 0, %s204
    %s205 = sphi 0, %s202
    %s206 = sphi 0, %s205
    %s222 = sphi 0, %s206
  $region4: #{up_forward.1} parent=0 // loop_header_branch
    %17 = sbr.rel (%p15) target = $region8
  $region5: #{up_forward.1} parent=0 // loop_body
    %s19 = ssub.s32 %s14, 1
    %s20 = ssub.s32 %s14, 2
    %s21 = sadd.s32 %s14, 1
    %s22 = ssub.s32 %s14, %s21
    %p23 = scmp.eq.s32.totalorder %s22, 0
    %s25 = sadd.s32 %s24, 1
    %s26 = scalar_select %p23, %s24, %s25
    %p29 = pneg %p23
    %p30 = scmp.eq.s32.totalorder %s14, 1
    %p31 = por %p29, %p30
    %p32 = scmp.ne.s32.totalorder %s24, %s27
    %p33 = scmp.eq.s32.totalorder %s14, 0
    %p34 = por %p32, %p33
    %p35 = scmp.ne.s32.totalorder %s24, %s27
    %p36 = scmp.eq.s32.totalorder %s19, 1
    %p37 = por %p35, %p36
    %p38 = scmp.ne.s32.totalorder %s27, %s28
    %p39 = scmp.eq.s32.totalorder %s19, 0
    %p40 = por %p38, %p39
    %p41 = scmp.ne.s32.totalorder %s27, %s28
    %p42 = scmp.eq.s32.totalorder %s20, 1
    %p43 = por %p41, %p42
    %p45 = scmp.ne.s32.totalorder %s28, %s44
    %p46 = scmp.eq.s32.totalorder %s20, 0
    %p47 = por %p45, %p46
    %s48 = ssub.s32 %s14, %s21
    %p49 = scmp.eq.s32.totalorder %s48, 0
    %s51 = sadd.s32 %s50, 1
    %s52 = scalar_select %p49, %s50, %s51
    %p55 = pneg %p49
    %p56 = scmp.eq.s32.totalorder %s14, 1
    %p57 = por %p55, %p56
    %p58 = scmp.ne.s32.totalorder %s50, %s53
    %p59 = scmp.eq.s32.totalorder %s14, 0
    %p60 = por %p58, %p59
    %p61 = scmp.ne.s32.totalorder %s50, %s53
    %p62 = scmp.eq.s32.totalorder %s19, 1
    %p63 = por %p61, %p62
    %p64 = scmp.ne.s32.totalorder %s53, %s54
    %p65 = scmp.eq.s32.totalorder %s19, 0
    %p66 = por %p64, %p65
    %p67 = scmp.ne.s32.totalorder %s53, %s54
    %p68 = scmp.eq.s32.totalorder %s20, 1
    %p69 = por %p67, %p68
    %p71 = scmp.ne.s32.totalorder %s54, %s70
    %p72 = scmp.eq.s32.totalorder %s20, 0
    %p73 = por %p71, %p72
    %s75 = sadd.s32 %s74, 1
    %p78 = scmp.eq.s32.totalorder %s14, 1
    %p79 = scmp.ne.s32.totalorder %s74, %s76
    %p80 = scmp.eq.s32.totalorder %s14, 0
    %p81 = por %p79, %p80
    %p82 = scmp.ne.s32.totalorder %s74, %s76
    %p83 = scmp.eq.s32.totalorder %s19, 1
    %p84 = por %p82, %p83
    %p85 = scmp.ne.s32.totalorder %s76, %s77
    %p86 = scmp.eq.s32.totalorder %s19, 0
    %p87 = por %p85, %p86
    %p88 = scmp.ne.s32.totalorder %s76, %s77
    %p89 = scmp.eq.s32.totalorder %s20, 1
    %p90 = por %p88, %p89
    %p92 = scmp.ne.s32.totalorder %s77, %s91
    %p93 = scmp.eq.s32.totalorder %s20, 0
    %p94 = por %p92, %p93
    %s96 = sadd.s32 %s95, 1
    %p99 = scmp.eq.s32.totalorder %s14, 1
    %p100 = scmp.ne.s32.totalorder %s95, %s97
    %p101 = scmp.eq.s32.totalorder %s14, 0
    %p102 = por %p100, %p101
    %p103 = scmp.ne.s32.totalorder %s95, %s97
    %p104 = scmp.eq.s32.totalorder %s19, 1
    %p105 = por %p103, %p104
    %p106 = scmp.ne.s32.totalorder %s97, %s98
    %p107 = scmp.eq.s32.totalorder %s19, 0
    %p108 = por %p106, %p107
    %p109 = scmp.ne.s32.totalorder %s97, %s98
    %p110 = scmp.eq.s32.totalorder %s20, 1
    %p111 = por %p109, %p110
    %p113 = scmp.ne.s32.totalorder %s98, %s112
    %p114 = scmp.eq.s32.totalorder %s20, 0
    %p115 = por %p113, %p114
    %s117 = sadd.s32 %s116, 1
    %p120 = scmp.eq.s32.totalorder %s14, 1
    %p121 = scmp.ne.s32.totalorder %s116, %s118
    %p122 = scmp.eq.s32.totalorder %s14, 0
    %p123 = por %p121, %p122
    %p124 = scmp.ne.s32.totalorder %s116, %s118
    %p125 = scmp.eq.s32.totalorder %s19, 1
    %p126 = por %p124, %p125
    %p127 = scmp.ne.s32.totalorder %s118, %s119
    %p128 = scmp.eq.s32.totalorder %s19, 0
    %p129 = por %p127, %p128
    %p130 = scmp.ne.s32.totalorder %s118, %s119
    %p131 = scmp.eq.s32.totalorder %s20, 1
    %p132 = por %p130, %p131
    %p134 = scmp.ne.s32.totalorder %s119, %s133
    %p135 = scmp.eq.s32.totalorder %s20, 0
    %p136 = por %p134, %p135
    %s138 = sadd.s32 %s137, 1
    %p141 = scmp.eq.s32.totalorder %s14, 1
    %p142 = scmp.ne.s32.totalorder %s137, %s139
    %p143 = scmp.eq.s32.totalorder %s14, 0
    %p144 = por %p142, %p143
    %p145 = scmp.ne.s32.totalorder %s137, %s139
    %p146 = scmp.eq.s32.totalorder %s19, 1
    %p147 = por %p145, %p146
    %p148 = scmp.ne.s32.totalorder %s139, %s140
    %p149 = scmp.eq.s32.totalorder %s19, 0
    %p150 = por %p148, %p149
    %p151 = scmp.ne.s32.totalorder %s139, %s140
    %p152 = scmp.eq.s32.totalorder %s20, 1
    %p153 = por %p151, %p152
    %p155 = scmp.ne.s32.totalorder %s140, %s154
    %p156 = scmp.eq.s32.totalorder %s20, 0
    %p157 = por %p155, %p156
    %s159 = sadd.s32 %s158, 1
    %p162 = scmp.eq.s32.totalorder %s14, 1
    %p163 = scmp.ne.s32.totalorder %s158, %s160
    %p164 = scmp.eq.s32.totalorder %s14, 0
    %p165 = por %p163, %p164
    %p166 = scmp.ne.s32.totalorder %s158, %s160
    %p167 = scmp.eq.s32.totalorder %s19, 1
    %p168 = por %p166, %p167
    %p169 = scmp.ne.s32.totalorder %s160, %s161
    %p170 = scmp.eq.s32.totalorder %s19, 0
    %p171 = por %p169, %p170
    %p172 = scmp.ne.s32.totalorder %s160, %s161
    %p173 = scmp.eq.s32.totalorder %s20, 1
    %p174 = por %p172, %p173
    %p176 = scmp.ne.s32.totalorder %s161, %s175
    %p177 = scmp.eq.s32.totalorder %s20, 0
    %p178 = por %p176, %p177
    %s180 = sadd.s32 %s179, 1
    %p183 = scmp.eq.s32.totalorder %s14, 1
    %p184 = scmp.ne.s32.totalorder %s179, %s181
    %p185 = scmp.eq.s32.totalorder %s14, 0
    %p186 = por %p184, %p185
    %p187 = scmp.ne.s32.totalorder %s179, %s181
    %p188 = scmp.eq.s32.totalorder %s19, 1
    %p189 = por %p187, %p188
    %p190 = scmp.ne.s32.totalorder %s181, %s182
    %p191 = scmp.eq.s32.totalorder %s19, 0
    %p192 = por %p190, %p191
    %p193 = scmp.ne.s32.totalorder %s181, %s182
    %p194 = scmp.eq.s32.totalorder %s20, 1
    %p195 = por %p193, %p194
    %p197 = scmp.ne.s32.totalorder %s182, %s196
    %p198 = scmp.eq.s32.totalorder %s20, 0
    %p199 = por %p197, %p198
    %s200 = ssub.s32 %s14, %s21
    %p201 = scmp.eq.s32.totalorder %s200, 0
    %s203 = sadd.s32 %s202, 1
    %s204 = scalar_select %p201, %s202, %s203
    %p207 = pneg %p201
    %p208 = scmp.eq.s32.totalorder %s14, 1
    %p209 = por %p207, %p208
    %p210 = scmp.ne.s32.totalorder %s202, %s205
    %p211 = scmp.eq.s32.totalorder %s14, 0
    %p212 = por %p210, %p211
    %p213 = scmp.ne.s32.totalorder %s202, %s205
    %p214 = scmp.eq.s32.totalorder %s19, 1
    %p215 = por %p213, %p214
    %p216 = scmp.ne.s32.totalorder %s205, %s206
    %p217 = scmp.eq.s32.totalorder %s19, 0
    %p218 = por %p216, %p217
    %p219 = scmp.ne.s32.totalorder %s205, %s206
    %p220 = scmp.eq.s32.totalorder %s20, 1
    %p221 = por %p219, %p220
    %p223 = scmp.ne.s32.totalorder %s206, %s222
    %p224 = scmp.eq.s32.totalorder %s20, 0
    %p225 = por %p223, %p224
    %p226 = scmp.le.s32.totalorder 1, %s14
    %p227 = scmp.lt.s32.totalorder %s14, 3
    %p228 = pnand %p226, %p227
    %p229 = pneg %p228
    // Predicated region
    $region9: #{up_forward.1} parent=5 // pred_check
      _
    $region10: #{up_forward.1} parent=5 // pred_check_branch
      %231 = sbr.rel (%p228) target = $region12
    $region11: #{up_forward.1} parent=5 // pred_region
      %s232 = ssub.s32 %s14, 1
      // Predicated region
      $region13: #{up_forward.1} parent=11 // pred_check
        %p233 = pneg %p87
      $region14: #{up_forward.1} parent=11 // pred_check_branch
        %235 = sbr.rel (%p233) target = $region16
      $region15: #{up_forward.1} parent=11 // pred_region
        _
      $region16: #{up_forward.1} parent=11 // pred_fallthru
        _
      // Predicated region
      $region17: #{up_forward.1} parent=11 // pred_check
        %p236 = pneg %p108
      $region18: #{up_forward.1} parent=11 // pred_check_branch
        %238 = sbr.rel (%p236) target = $region20
      $region19: #{up_forward.1} parent=11 // pred_region
        _
      $region20: #{up_forward.1} parent=11 // pred_fallthru
        _
      // Predicated region
      $region21: #{up_forward.1} parent=11 // pred_check
        %p239 = pneg %p129
      $region22: #{up_forward.1} parent=11 // pred_check_branch
        %241 = sbr.rel (%p239) target = $region24
      $region23: #{up_forward.1} parent=11 // pred_region
        _
      $region24: #{up_forward.1} parent=11 // pred_fallthru
        _
      // Predicated region
      $region25: #{up_forward.1} parent=11 // pred_check
        %p242 = pneg %p150
      $region26: #{up_forward.1} parent=11 // pred_check_branch
        %244 = sbr.rel (%p242) target = $region28
      $region27: #{up_forward.1} parent=11 // pred_region
        _
      $region28: #{up_forward.1} parent=11 // pred_fallthru
        _
      // Predicated region
      $region29: #{up_forward.1} parent=11 // pred_check
        %p245 = pneg %p171
      $region30: #{up_forward.1} parent=11 // pred_check_branch
        %247 = sbr.rel (%p245) target = $region32
      $region31: #{up_forward.1} parent=11 // pred_region
        _
      $region32: #{up_forward.1} parent=11 // pred_fallthru
        _
      // Predicated region
      $region33: #{up_forward.1} parent=11 // pred_check
        %p248 = pneg %p192
      $region34: #{up_forward.1} parent=11 // pred_check_branch
        %250 = sbr.rel (%p248) target = $region36
      $region35: #{up_forward.1} parent=11 // pred_region
        _
      $region36: #{up_forward.1} parent=11 // pred_fallthru
        _
    $region12: #{up_forward.1} parent=5 // pred_fallthru
      _
    %p251 = scmp.lt.s32.totalorder %s14, 2
    // Predicated region
    $region37: #{up_forward.1} parent=5 // pred_check
      %p252 = pneg %p251
    $region38: #{up_forward.1} parent=5 // pred_check_branch
      %254 = sbr.rel (%p252) target = $region40
    $region39: #{up_forward.1} parent=5 // pred_region
      // Predicated region
      $region41: #{up_forward.1} parent=39 // pred_check
        %p255 = pneg %p34
      $region42: #{up_forward.1} parent=39 // pred_check_branch
        %257 = sbr.rel (%p255) target = $region44
      $region43: #{up_forward.1} parent=39 // pred_region
        %p258 = scmp.lt.s32.totalorder %s14, 1
        %s259 = scalar_select %p258, %s14, 1
        %s260 = smul.addr %s259, 4
        %s261 = scalar_lea.vmem %s0, %s260
      $region44: #{up_forward.1} parent=39 // pred_fallthru
        _
      // Predicated region
      $region45: #{up_forward.1} parent=39 // pred_check
        %p262 = pneg %p60
      $region46: #{up_forward.1} parent=39 // pred_check_branch
        %264 = sbr.rel (%p262) target = $region48
      $region47: #{up_forward.1} parent=39 // pred_region
        %p265 = scmp.lt.s32.totalorder %s14, 1
        %s266 = scalar_select %p265, %s14, 1
        %s267 = smul.addr %s266, 3
        %s268 = smul.addr %s267, 4
        %s269 = scalar_lea.vmem %s1, %s268
      $region48: #{up_forward.1} parent=39 // pred_fallthru
        _
    $region40: #{up_forward.1} parent=5 // pred_fallthru
      _
    %p270 = scmp.le.s32.totalorder 1, %s14
    %p271 = scmp.lt.s32.totalorder %s14, 3
    %p272 = pnand %p270, %p271
    %p273 = pneg %p272
    // Predicated region
    $region49: #{up_forward.1} parent=5 // pred_check
      _
    $region50: #{up_forward.1} parent=5 // pred_check_branch
      %275 = sbr.rel (%p272) target = $region52
    $region51: #{up_forward.1} parent=5 // pred_region
      %s276 = ssub.s32 %s14, 1
      %p277 = scmp.lt.s32.totalorder %s19, 1
      %s278 = scalar_select %p277, %s19, 1
      %s279 = smul.addr %s278, 4
      %s280 = scalar_lea.vmem %s0, %s279
      %p281 = pneg %p40
      %p282 = pneg %p37
      %p283 = scmp.lt.s32.totalorder %s19, 1
      %s284 = scalar_select %p283, %s19, 1
      %s285 = smul.addr %s284, 3
      %s286 = smul.addr %s285, 4
      %s287 = scalar_lea.vmem %s1, %s286
      %p288 = pneg %p66
      %p289 = pneg %p63
      %p290 = pneg %p87
      %p291 = pneg %p84
      %p292 = pneg %p108
      %p293 = pneg %p105
      %p294 = pneg %p129
      %p295 = pneg %p126
      %p296 = pneg %p150
      %p297 = pneg %p147
      %p298 = pneg %p171
      %p299 = pneg %p168
      %p300 = pneg %p192
      %p301 = pneg %p189
      %p302 = pneg %p218
      %p303 = pneg %p215
      %p304 = scmp.lt.s32.totalorder %s19, 1
      %s305 = scalar_select %p304, %s19, 1
      %s306 = smul.addr %s305, 3
      %s307 = smul.addr %s306, 4
      %s308 = scalar_lea.vmem %s8, %s307
      %p309 = scmp.lt.s32.totalorder %s19, 1
      %s310 = scalar_select %p309, %s19, 1
      %s311 = smul.addr %s310, 4
      %s312 = scalar_lea.vmem %s0, %s311
      %p313 = scmp.lt.s32.totalorder %s19, 1
      %s314 = scalar_select %p313, %s19, 1
      %s315 = smul.addr %s314, 3
      %s316 = smul.addr %s315, 4
      %s317 = scalar_lea.vmem %s1, %s316
      %p318 = scmp.lt.s32.totalorder %s19, 1
      %s319 = scalar_select %p318, %s19, 1
      %s320 = smul.addr %s319, 3
      %s321 = smul.addr %s320, 4
      %s322 = scalar_lea.vmem %s8, %s321
      %v323 = vld [vmem:[%s317] sm:$0xff]
      %v324 = vld [vmem:[%s317 + $0x8] sm:$0xf]
      %327 = vst [vmem:[#allocation1] ss:$2 sm:$0xff] %v323
      %s328 = scalar_lea.vmem [#allocation1], 16
      %329 = vst [vmem:[%s328] ss:$2 sm:$0xff] %v324
      %v330 = vld.sshfl [vmem:[#allocation1] sm:$0xff pattern:$0x75316420]
      %v331 = vld.sshfl [vmem:[#allocation1 + $0x8] sm:$0xff pattern:$0x75316420]
      %v332 = vld.sshfl [vmem:[#allocation1 + $0x10] sm:$0xff pattern:$0x75316420]
      %336 = vst [vmem:[#allocation2] sm:$0xf] %v330
      %337 = vst [vmem:[#allocation2 + $0x8] sm:$0xf] %v331
      %vm338 = vcmask 699392
      %339 = vst.msk [vmem:[#allocation2 + $0x10] sm:$0xf] %vm338, %v332
      %v340 = vld [vmem:[%s312] sm:$0xf]
      %v341 = vld [vmem:[%s2] sm:$0xff]
      %v342 = vld [vmem:[%s2 + $0x8] sm:$0xff]
      %v343 = vld [vmem:[%s2 + $0x10] sm:$0xff]
      %v344 = vld [vmem:[%s2 + $0x18] sm:$0xff]
      %v345 = vld [vmem:[%s2 + $0x20] sm:$0xff]
      %v346 = vld [vmem:[%s2 + $0x28] sm:$0xff]
      %v347 = vld [vmem:[%s2 + $0x30] sm:$0xff]
      %v348 = vld [vmem:[%s2 + $0x38] sm:$0xff]
      %v349 = vld [vmem:[%s2 + $0x40] sm:$0xff]
      %v350 = vld [vmem:[%s2 + $0x48] sm:$0xff]
      %v351 = vld [vmem:[%s2 + $0x50] sm:$0xff]
      %v352 = vld [vmem:[%s2 + $0x58] sm:$0xff]
      %v353 = vld [vmem:[%s2 + $0x60] sm:$0xff]
      %v354 = vld [vmem:[%s2 + $0x68] sm:$0xff]
      %v355 = vld [vmem:[%s2 + $0x70] sm:$0xff]
      %v356 = vld [vmem:[%s2 + $0x78] sm:$0xff]
      %v357 = vld [vmem:[%s2 + $0x80] sm:$0xff]
      %v358 = vld [vmem:[%s2 + $0x88] sm:$0xff]
      %v359 = vld [vmem:[%s2 + $0x90] sm:$0xff]
      %v360 = vld [vmem:[%s2 + $0x98] sm:$0xff]
      %v361 = vld [vmem:[%s2 + $0xa0] sm:$0xff]
      %v362 = vld [vmem:[%s2 + $0xa8] sm:$0xff]
      %v363 = vld [vmem:[%s2 + $0xb0] sm:$0xff]
      %v364 = vld [vmem:[%s2 + $0xb8] sm:$0xff]
      %vm365 = vcmask 523264
      %v367 = vsel %vm365, %v340, 0
      %369 = vmatpush.msra.mxu0 0.0
      %370 = vmatpush.msra.mxu0 0.0
      %371 = vmatpush.msra.mxu0 0.0
      %372 = vmatpush.msra.mxu0 0.0
      %373 = vmatpush.msra.mxu0 0.0
      %374 = vmatpush.msra.mxu0 0.0
      %375 = vmatpush.msra.mxu0 0.0
      %376 = vmatpush.msra.mxu0 0.0
      %377 = vmatpush.msra.mxu0 %v362
      %378 = vmatpush.msra.mxu0 %v359
      %379 = vmatpush.msra.mxu0 %v356
      %380 = vmatpush.msra.mxu0 %v353
      %381 = vmatpush.msra.mxu0 %v350
      %382 = vmatpush.msra.mxu0 %v347
      %383 = vmatpush.msra.mxu0 %v344
      %384 = vmatpush.msra.mxu0 %v341
      %385 = vmatmul.f32.gmra.mxu0 %v367
      %v386 = vpop.f32.mrf.mxu0
      %v387 = vadd.f32 0.0, %v386
      %388 = vdwg.mxu0
      %389 = vmatpush.msra.mxu0 0.0
      %390 = vmatpush.msra.mxu0 0.0
      %391 = vmatpush.msra.mxu0 0.0
      %392 = vmatpush.msra.mxu0 0.0
      %393 = vmatpush.msra.mxu0 0.0
      %394 = vmatpush.msra.mxu0 0.0
      %395 = vmatpush.msra.mxu0 0.0
      %396 = vmatpush.msra.mxu0 0.0
      %397 = vmatpush.msra.mxu0 %v363
      %398 = vmatpush.msra.mxu0 %v360
      %399 = vmatpush.msra.mxu0 %v357
      %400 = vmatpush.msra.mxu0 %v354
      %401 = vmatpush.msra.mxu0 %v351
      %402 = vmatpush.msra.mxu0 %v348
      %403 = vmatpush.msra.mxu0 %v345
      %404 = vmatpush.msra.mxu0 %v342
      %405 = vmatmul.f32.gmra.mxu0 %v367
      %v406 = vpop.f32.mrf.mxu0
      %v407 = vadd.f32 0.0, %v406
      %408 = vdwg.mxu0
      %409 = vmatpush.msra.mxu0 0.0
      %410 = vmatpush.msra.mxu0 0.0
      %411 = vmatpush.msra.mxu0 0.0
      %412 = vmatpush.msra.mxu0 0.0
      %413 = vmatpush.msra.mxu0 0.0
      %414 = vmatpush.msra.mxu0 0.0
      %415 = vmatpush.msra.mxu0 0.0
      %416 = vmatpush.msra.mxu0 0.0
      %417 = vmatpush.msra.mxu0 %v364
      %418 = vmatpush.msra.mxu0 %v361
      %419 = vmatpush.msra.mxu0 %v358
      %420 = vmatpush.msra.mxu0 %v355
      %421 = vmatpush.msra.mxu0 %v352
      %422 = vmatpush.msra.mxu0 %v349
      %423 = vmatpush.msra.mxu0 %v346
      %424 = vmatpush.msra.mxu0 %v343
      %425 = vmatmul.f32.gmra.mxu0 %v367
      %v426 = vpop.f32.mrf.mxu0
      %v427 = vadd.f32 0.0, %v426
      %428 = vdwg.mxu0
      %v432 = vrot.slane %v387, 4
      %v433 = vrot.slane %v407, 4
      %v434 = vrot.slane %v427, 4
      %438 = vst [vmem:[#allocation2] sm:$0xf0] %v432
      %439 = vst [vmem:[#allocation2 + $0x8] sm:$0xf0] %v433
      %vm440 = vcmask 703492
      %441 = vst.msk [vmem:[#allocation2 + $0x10] sm:$0xf0] %vm440, %v434
      %v442 = vld [vmem:[#allocation2] sm:$0xff]
      %v443 = vld [vmem:[#allocation2 + $0x8] sm:$0xff]
      %v444 = vld [vmem:[#allocation2 + $0x10] sm:$0xff]
      %445 = vst [vmem:[#allocation4] sm:$0xff] %v442
      %446 = vst [vmem:[#allocation4 + $0x8] sm:$0xff] %v443
      %vm447 = vcmask 261120
      %448 = vst.msk [vmem:[#allocation4 + $0x10] sm:$0xff] %vm447, %v444
      %v449 = vld [vmem:[#allocation2] sm:$0xff]
      %v450 = vld [vmem:[#allocation2 + $0x8] sm:$0xff]
      %v451 = vld [vmem:[#allocation2 + $0x10] sm:$0xff]
      %455 = vrot.lane.b32.xlu0 %v449, 127
      %v456 = vpop.permute.xlu0 %455
      %457 = vrot.lane.b32.xlu0 %v450, 127
      %v458 = vpop.permute.xlu0 %457
      %459 = vrot.lane.b32.xlu0 %v451, 127
      %v460 = vpop.permute.xlu0 %459
      %vm461 = vcmask 1039360
      %v462 = vsel %vm461, %v456, %v458
      %v463 = vsel %vm461, %v458, %v460
      %467 = vst [vmem:[#allocation4 + $0x18] sm:$0xff] %v462
      %468 = vst [vmem:[#allocation4 + $0x20] sm:$0xff] %v463
      %469 = vst.msk [vmem:[#allocation4 + $0x28] sm:$0xff] %vm447, %v460
      %v470 = vld [vmem:[#allocation2] sm:$0xff]
      %v471 = vld [vmem:[#allocation2 + $0x8] sm:$0xff]
      %v472 = vld [vmem:[#allocation2 + $0x10] sm:$0xff]
      %476 = vrot.lane.b32.xlu0 %v470, 126
      %v477 = vpop.permute.xlu0 %476
      %478 = vrot.lane.b32.xlu0 %v471, 126
      %v479 = vpop.permute.xlu0 %478
      %480 = vrot.lane.b32.xlu0 %v472, 126
      %v481 = vpop.permute.xlu0 %480
      %vm482 = vcmask 1031168
      %v483 = vsel %vm482, %v477, %v479
      %v484 = vsel %vm482, %v479, %v481
      %488 = vst [vmem:[#allocation4 + $0x30] sm:$0xff] %v483
      %489 = vst [vmem:[#allocation4 + $0x38] sm:$0xff] %v484
      %490 = vst.msk [vmem:[#allocation4 + $0x40] sm:$0xff] %vm447, %v481
      %v491 = vld [vmem:[#allocation2] sm:$0xff]
      %v492 = vld [vmem:[#allocation2 + $0x8] sm:$0xff]
      %v493 = vld [vmem:[#allocation2 + $0x10] sm:$0xff]
      %497 = vrot.lane.b32.xlu0 %v491, 110
      %v498 = vpop.permute.xlu0 %497
      %499 = vrot.lane.b32.xlu0 %v492, 110
      %v500 = vpop.permute.xlu0 %499
      %501 = vrot.lane.b32.xlu0 %v493, 110
      %v502 = vpop.permute.xlu0 %501
      %vm503 = vcmask 900096
      %v504 = vsel %vm503, %v498, %v500
      %v505 = vsel %vm503, %v500, %v502
      %509 = vst [vmem:[#allocation4 + $0x48] sm:$0xff] %v504
      %510 = vst [vmem:[#allocation4 + $0x50] sm:$0xff] %v505
      %511 = vst.msk [vmem:[#allocation4 + $0x58] sm:$0xff] %vm447, %v502
      %v512 = vld [vmem:[#allocation2] sm:$0xff]
      %v513 = vld [vmem:[#allocation2 + $0x8] sm:$0xff]
      %v514 = vld [vmem:[#allocation2 + $0x10] sm:$0xff]
      %518 = vrot.lane.b32.xlu0 %v512, 109
      %v519 = vpop.permute.xlu0 %518
      %520 = vrot.lane.b32.xlu0 %v513, 109
      %v521 = vpop.permute.xlu0 %520
      %522 = vrot.lane.b32.xlu0 %v514, 109
      %v523 = vpop.permute.xlu0 %522
      %vm524 = vcmask 891904
      %v525 = vsel %vm524, %v519, %v521
      %v526 = vsel %vm524, %v521, %v523
      %530 = vst [vmem:[#allocation4 + $0x60] sm:$0xff] %v525
      %531 = vst [vmem:[#allocation4 + $0x68] sm:$0xff] %v526
      %532 = vst.msk [vmem:[#allocation4 + $0x70] sm:$0xff] %vm447, %v523
      %v533 = vld [vmem:[#allocation2] sm:$0xff]
      %v534 = vld [vmem:[#allocation2 + $0x8] sm:$0xff]
      %v535 = vld [vmem:[#allocation2 + $0x10] sm:$0xff]
      %539 = vrot.lane.b32.xlu0 %v533, 108
      %v540 = vpop.permute.xlu0 %539
      %541 = vrot.lane.b32.xlu0 %v534, 108
      %v542 = vpop.permute.xlu0 %541
      %543 = vrot.lane.b32.xlu0 %v535, 108
      %v544 = vpop.permute.xlu0 %543
      %vm545 = vcmask 883712
      %v546 = vsel %vm545, %v540, %v542
      %v547 = vsel %vm545, %v542, %v544
      %551 = vst [vmem:[#allocation4 + $0x78] sm:$0xff] %v546
      %552 = vst [vmem:[#allocation4 + $0x80] sm:$0xff] %v547
      %553 = vst.msk [vmem:[#allocation4 + $0x88] sm:$0xff] %vm447, %v544
      %v554 = vld [vmem:[#allocation2] sm:$0xff]
      %v555 = vld [vmem:[#allocation2 + $0x8] sm:$0xff]
      %v556 = vld [vmem:[#allocation2 + $0x10] sm:$0xff]
      %560 = vrot.lane.b32.xlu0 %v554, 92
      %v561 = vpop.permute.xlu0 %560
      %562 = vrot.lane.b32.xlu0 %v555, 92
      %v563 = vpop.permute.xlu0 %562
      %564 = vrot.lane.b32.xlu0 %v556, 92
      %v565 = vpop.permute.xlu0 %564
      %vm566 = vcmask 752640
      %v567 = vsel %vm566, %v561, %v563
      %v568 = vsel %vm566, %v563, %v565
      %572 = vst [vmem:[#allocation4 + $0x90] sm:$0xff] %v567
      %573 = vst [vmem:[#allocation4 + $0x98] sm:$0xff] %v568
      %574 = vst.msk [vmem:[#allocation4 + $0xa0] sm:$0xff] %vm447, %v565
      %v575 = vld [vmem:[#allocation2] sm:$0xff]
      %v576 = vld [vmem:[#allocation2 + $0x8] sm:$0xff]
      %v577 = vld [vmem:[#allocation2 + $0x10] sm:$0xff]
      %581 = vrot.lane.b32.xlu0 %v575, 91
      %v582 = vpop.permute.xlu0 %581
      %583 = vrot.lane.b32.xlu0 %v576, 91
      %v584 = vpop.permute.xlu0 %583
      %585 = vrot.lane.b32.xlu0 %v577, 91
      %v586 = vpop.permute.xlu0 %585
      %vm587 = vcmask 744448
      %v588 = vsel %vm587, %v582, %v584
      %v589 = vsel %vm587, %v584, %v586
      %593 = vst [vmem:[#allocation4 + $0xa8] sm:$0xff] %v588
      %594 = vst [vmem:[#allocation4 + $0xb0] sm:$0xff] %v589
      %595 = vst.msk [vmem:[#allocation4 + $0xb8] sm:$0xff] %vm447, %v586
      %v596 = vld [vmem:[#allocation2] sm:$0xff]
      %v597 = vld [vmem:[#allocation2 + $0x8] sm:$0xff]
      %v598 = vld [vmem:[#allocation2 + $0x10] sm:$0xff]
      %602 = vrot.lane.b32.xlu0 %v596, 90
      %v603 = vpop.permute.xlu0 %602
      %604 = vrot.lane.b32.xlu0 %v597, 90
      %v605 = vpop.permute.xlu0 %604
      %606 = vrot.lane.b32.xlu0 %v598, 90
      %v607 = vpop.permute.xlu0 %606
      %vm608 = vcmask 736256
      %v609 = vsel %vm608, %v603, %v605
      %v610 = vsel %vm608, %v605, %v607
      %614 = vst [vmem:[#allocation4 + $0xc0] sm:$0xff] %v609
      %615 = vst [vmem:[#allocation4 + $0xc8] sm:$0xff] %v610
      %616 = vst.msk [vmem:[#allocation4 + $0xd0] sm:$0xff] %vm447, %v607
      %v617 = vld [vmem:[%s4] sm:$0xf]
      %v618 = vld [vmem:[#allocation4] sm:$0xff]
      %v619 = vld [vmem:[#allocation4 + $0x8] sm:$0xff]
      %v620 = vld [vmem:[#allocation4 + $0x10] sm:$0xff]
      %v621 = vld [vmem:[#allocation4 + $0x18] sm:$0xff]
      %v622 = vld [vmem:[#allocation4 + $0x20] sm:$0xff]
      %v623 = vld [vmem:[#allocation4 + $0x28] sm:$0xff]
      %v624 = vld [vmem:[#allocation4 + $0x30] sm:$0xff]
      %v625 = vld [vmem:[#allocation4 + $0x38] sm:$0xff]
      %v626 = vld [vmem:[#allocation4 + $0x40] sm:$0xff]
      %v627 = vld [vmem:[#allocation4 + $0x48] sm:$0xff]
      %v628 = vld [vmem:[#allocation4 + $0x50] sm:$0xff]
      %v629 = vld [vmem:[#allocation4 + $0x58] sm:$0xff]
      %v630 = vld [vmem:[#allocation4 + $0x60] sm:$0xff]
      %v631 = vld [vmem:[#allocation4 + $0x68] sm:$0xff]
      %v632 = vld [vmem:[#allocation4 + $0x70] sm:$0xff]
      %v633 = vld [vmem:[#allocation4 + $0x78] sm:$0xff]
      %v634 = vld [vmem:[#allocation4 + $0x80] sm:$0xff]
      %v635 = vld [vmem:[#allocation4 + $0x88] sm:$0xff]
      %v636 = vld [vmem:[#allocation4 + $0x90] sm:$0xff]
      %v637 = vld [vmem:[#allocation4 + $0x98] sm:$0xff]
      %v638 = vld [vmem:[#allocation4 + $0xa0] sm:$0xff]
      %v639 = vld [vmem:[#allocation4 + $0xa8] sm:$0xff]
      %v640 = vld [vmem:[#allocation4 + $0xb0] sm:$0xff]
      %v641 = vld [vmem:[#allocation4 + $0xb8] sm:$0xff]
      %v642 = vld [vmem:[#allocation4 + $0xc0] sm:$0xff]
      %v643 = vld [vmem:[#allocation4 + $0xc8] sm:$0xff]
      %v644 = vld [vmem:[#allocation4 + $0xd0] sm:$0xff]
      %v645 = vld [vmem:[%s5] sm:$0xf]
      %647 = vset.pattern.permute.xlu0 0
      %648 = vperm.xlu0 %647, %v645
      %v649 = vpop.permute.xlu0 %648
      %vm651 = vcmask 588800
      %v653 = vsel %vm651, %v617, 0
      %655 = vmatpush.msra.mxu0 0.0
      %656 = vmatpush.msra.mxu0 0.0
      %657 = vmatpush.msra.mxu0 0.0
      %658 = vmatpush.msra.mxu0 0.0
      %659 = vmatpush.msra.mxu0 0.0
      %660 = vmatpush.msra.mxu0 0.0
      %661 = vmatpush.msra.mxu0 0.0
      %662 = vmatpush.msra.mxu0 %v642
      %663 = vmatpush.msra.mxu0 %v639
      %664 = vmatpush.msra.mxu0 %v636
      %665 = vmatpush.msra.mxu0 %v633
      %666 = vmatpush.msra.mxu0 %v630
      %667 = vmatpush.msra.mxu0 %v627
      %668 = vmatpush.msra.mxu0 %v624
      %669 = vmatpush.msra.mxu0 %v621
      %670 = vmatpush.msra.mxu0 %v618
      %671 = vmatmul.f32.gmra.mxu0 %v653
      %v672 = vpop.f32.mrf.mxu0
      %v673 = vadd.f32 %v649, %v672
      %674 = vdwg.mxu0
      %675 = vmatpush.msra.mxu0 0.0
      %676 = vmatpush.msra.mxu0 0.0
      %677 = vmatpush.msra.mxu0 0.0
      %678 = vmatpush.msra.mxu0 0.0
      %679 = vmatpush.msra.mxu0 0.0
      %680 = vmatpush.msra.mxu0 0.0
      %681 = vmatpush.msra.mxu0 0.0
      %682 = vmatpush.msra.mxu0 %v643
      %683 = vmatpush.msra.mxu0 %v640
      %684 = vmatpush.msra.mxu0 %v637
      %685 = vmatpush.msra.mxu0 %v634
      %686 = vmatpush.msra.mxu0 %v631
      %687 = vmatpush.msra.mxu0 %v628
      %688 = vmatpush.msra.mxu0 %v625
      %689 = vmatpush.msra.mxu0 %v622
      %690 = vmatpush.msra.mxu0 %v619
      %691 = vmatmul.f32.gmra.mxu0 %v653
      %v692 = vpop.f32.mrf.mxu0
      %v693 = vadd.f32 %v649, %v692
      %694 = vdwg.mxu0
      %695 = vmatpush.msra.mxu0 0.0
      %696 = vmatpush.msra.mxu0 0.0
      %697 = vmatpush.msra.mxu0 0.0
      %698 = vmatpush.msra.mxu0 0.0
      %699 = vmatpush.msra.mxu0 0.0
      %700 = vmatpush.msra.mxu0 0.0
      %701 = vmatpush.msra.mxu0 0.0
      %702 = vmatpush.msra.mxu0 %v644
      %703 = vmatpush.msra.mxu0 %v641
      %704 = vmatpush.msra.mxu0 %v638
      %705 = vmatpush.msra.mxu0 %v635
      %706 = vmatpush.msra.mxu0 %v632
      %707 = vmatpush.msra.mxu0 %v629
      %708 = vmatpush.msra.mxu0 %v626
      %709 = vmatpush.msra.mxu0 %v623
      %710 = vmatpush.msra.mxu0 %v620
      %711 = vmatmul.f32.gmra.mxu0 %v653
      %v712 = vpop.f32.mrf.mxu0
      %v713 = vadd.f32 %v649, %v712
      %714 = vdwg.mxu0
      %v715 = vmax.f32 %v673, 0.0
      %v716 = vmax.f32 %v693, 0.0
      %v717 = vmax.f32 %v713, 0.0
      %718 = vst [vmem:[#allocation3] sm:$0xff] 0.0
      %719 = vst.msk [vmem:[#allocation3 + $0x8] sm:$0xf] %vm338, 0.0
      %v720 = vld [vmem:[%s3] sm:$0x7]
      %v722 = vperm.slane %v720, 0
      %v723 = vperm.slane %v720, 1
      %v724 = vperm.slane %v720, 2
      %v728 = vmul.f32 %v715, %v722
      %v729 = vmul.f32 %v716, %v723
      %v730 = vmul.f32 %v717, %v724
      %v734 = vrot.slane %v729, 4
      %vm735 = vcmask 1043456
      %v736 = vsel %vm735, %v728, %v734
      %737 = vrot.lane.b32.xlu0 %v736, 19
      %v738 = vpop.permute.xlu0 %737
      %739 = vrot.lane.b32.xlu0 %v730, 19
      %v740 = vpop.permute.xlu0 %739
      %v741 = vrot.slane %v738, 4
      %vm742 = vcmask 154624
      %v743 = vsel %vm742, %v741, %v738
      %v744 = vsel %vm742, %v741, %v740
      %vm747 = vcmask 1043608
      %vm748 = vcmask 1047556
      %vm749 = vmor %vm748, %vm747
      %750 = vst.msk [vmem:[#allocation3] sm:$0xff] %vm749, %v743
      %vm751 = vcmask 412672
      %752 = vst.msk [vmem:[#allocation3 + $0x8] sm:$0xf] %vm751, %v744
      %v753 = vld [vmem:[#allocation3] sm:$0xff]
      %v754 = vld [vmem:[#allocation3 + $0x8] sm:$0xf]
      %757 = vst [vmem:[#allocation1] ss:$2 sm:$0xff] %v753
      %s758 = scalar_lea.vmem [#allocation1], 16
      %759 = vst [vmem:[%s758] ss:$2 sm:$0xff] %v754
      %v760 = vld.sshfl [vmem:[#allocation1] sm:$0xff pattern:$0x75316420]
      %v761 = vld.sshfl [vmem:[#allocation1 + $0x8] sm:$0xff pattern:$0x75316420]
      %v762 = vld.sshfl [vmem:[#allocation1 + $0x10] sm:$0xff pattern:$0x75316420]
      %766 = vst [vmem:[#allocation5] sm:$0xf] %v760
      %767 = vst [vmem:[#allocation5 + $0x8] sm:$0xf] %v761
      %vm768 = vcmask 257024
      %769 = vst.msk [vmem:[#allocation5 + $0x10] sm:$0xf] %vm768, %v762
      %v770 = vld [vmem:[#allocation3] sm:$0xff]
      %v771 = vld [vmem:[#allocation3 + $0x8] sm:$0xf]
      %s774 = scalar_lea.vmem [#allocation1], 1
      %775 = vst [vmem:[%s774] ss:$2 sm:$0xff] %v770
      %s776 = scalar_lea.vmem [#allocation1], 17
      %777 = vst [vmem:[%s776] ss:$2 sm:$0xff] %v771
      %v778 = vld.sshfl [vmem:[#allocation1] sm:$0xff pattern:$0x75316420]
      %v779 = vld.sshfl [vmem:[#allocation1 + $0x8] sm:$0xff pattern:$0x75316420]
      %v780 = vld.sshfl [vmem:[#allocation1 + $0x10] sm:$0xff pattern:$0x75316420]
      %781 = vrot.lane.b32.xlu0 %v778, 127
      %v782 = vpop.permute.xlu0 %781
      %783 = vrot.lane.b32.xlu0 %v779, 127
      %v784 = vpop.permute.xlu0 %783
      %785 = vrot.lane.b32.xlu0 %v780, 127
      %v786 = vpop.permute.xlu0 %785
      %v787 = vsel %vm461, %v782, %v784
      %v788 = vsel %vm461, %v784, %v786
      %792 = vst [vmem:[#allocation5] sm:$0xf0] %v787
      %793 = vst [vmem:[#allocation5 + $0x8] sm:$0xf0] %v788
      %vm794 = vcmask 261124
      %795 = vst.msk [vmem:[#allocation5 + $0x10] sm:$0xf0] %vm794, %v786
      %v796 = vld [vmem:[#allocation3] sm:$0xff]
      %v797 = vld [vmem:[#allocation3 + $0x8] sm:$0xf]
      %800 = vst [vmem:[#allocation1] ss:$2 sm:$0xff] %v796
      %s801 = scalar_lea.vmem [#allocation1], 16
      %802 = vst [vmem:[%s801] ss:$2 sm:$0xff] %v797
      %v803 = vld.sshfl [vmem:[#allocation1] sm:$0xff pattern:$0x75316420]
      %v804 = vld.sshfl [vmem:[#allocation1 + $0x8] sm:$0xff pattern:$0x75316420]
      %v805 = vld.sshfl [vmem:[#allocation1 + $0x10] sm:$0xff pattern:$0x75316420]
      %806 = vrot.lane.b32.xlu0 %v803, 126
      %v807 = vpop.permute.xlu0 %806
      %808 = vrot.lane.b32.xlu0 %v804, 126
      %v809 = vpop.permute.xlu0 %808
      %810 = vrot.lane.b32.xlu0 %v805, 126
      %v811 = vpop.permute.xlu0 %810
      %v812 = vsel %vm482, %v807, %v809
      %v813 = vsel %vm482, %v809, %v811
      %817 = vst [vmem:[#allocation5 + $0x18] sm:$0xf] %v812
      %818 = vst [vmem:[#allocation5 + $0x20] sm:$0xf] %v813
      %819 = vst.msk [vmem:[#allocation5 + $0x28] sm:$0xf] %vm768, %v811
      %v820 = vld [vmem:[#allocation3] sm:$0xff]
      %v821 = vld [vmem:[#allocation3 + $0x8] sm:$0xf]
      %s824 = scalar_lea.vmem [#allocation1], 1
      %825 = vst [vmem:[%s824] ss:$2 sm:$0xff] %v820
      %s826 = scalar_lea.vmem [#allocation1], 17
      %827 = vst [vmem:[%s826] ss:$2 sm:$0xff] %v821
      %v828 = vld.sshfl [vmem:[#allocation1] sm:$0xff pattern:$0x75316420]
      %v829 = vld.sshfl [vmem:[#allocation1 + $0x8] sm:$0xff pattern:$0x75316420]
      %v830 = vld.sshfl [vmem:[#allocation1 + $0x10] sm:$0xff pattern:$0x75316420]
      %831 = vrot.lane.b32.xlu0 %v828, 110
      %v832 = vpop.permute.xlu0 %831
      %833 = vrot.lane.b32.xlu0 %v829, 110
      %v834 = vpop.permute.xlu0 %833
      %835 = vrot.lane.b32.xlu0 %v830, 110
      %v836 = vpop.permute.xlu0 %835
      %v837 = vsel %vm503, %v832, %v834
      %v838 = vsel %vm503, %v834, %v836
      %842 = vst [vmem:[#allocation5 + $0x18] sm:$0xf0] %v837
      %843 = vst [vmem:[#allocation5 + $0x20] sm:$0xf0] %v838
      %844 = vst.msk [vmem:[#allocation5 + $0x28] sm:$0xf0] %vm794, %v836
      %v845 = vld [vmem:[#allocation3] sm:$0xff]
      %v846 = vld [vmem:[#allocation3 + $0x8] sm:$0xf]
      %849 = vst [vmem:[#allocation1] ss:$2 sm:$0xff] %v845
      %s850 = scalar_lea.vmem [#allocation1], 16
      %851 = vst [vmem:[%s850] ss:$2 sm:$0xff] %v846
      %v852 = vld.sshfl [vmem:[#allocation1] sm:$0xff pattern:$0x75316420]
      %v853 = vld.sshfl [vmem:[#allocation1 + $0x8] sm:$0xff pattern:$0x75316420]
      %v854 = vld.sshfl [vmem:[#allocation1 + $0x10] sm:$0xff pattern:$0x75316420]
      %855 = vrot.lane.b32.xlu0 %v852, 109
      %v856 = vpop.permute.xlu0 %855
      %857 = vrot.lane.b32.xlu0 %v853, 109
      %v858 = vpop.permute.xlu0 %857
      %859 = vrot.lane.b32.xlu0 %v854, 109
      %v860 = vpop.permute.xlu0 %859
      %v861 = vsel %vm524, %v856, %v858
      %v862 = vsel %vm524, %v858, %v860
      %866 = vst [vmem:[#allocation5 + $0x30] sm:$0xf] %v861
      %867 = vst [vmem:[#allocation5 + $0x38] sm:$0xf] %v862
      %868 = vst.msk [vmem:[#allocation5 + $0x40] sm:$0xf] %vm768, %v860
      %v869 = vld [vmem:[#allocation3] sm:$0xff]
      %v870 = vld [vmem:[#allocation3 + $0x8] sm:$0xf]
      %s873 = scalar_lea.vmem [#allocation1], 1
      %874 = vst [vmem:[%s873] ss:$2 sm:$0xff] %v869
      %s875 = scalar_lea.vmem [#allocation1], 17
      %876 = vst [vmem:[%s875] ss:$2 sm:$0xff] %v870
      %v877 = vld.sshfl [vmem:[#allocation1] sm:$0xff pattern:$0x75316420]
      %v878 = vld.sshfl [vmem:[#allocation1 + $0x8] sm:$0xff pattern:$0x75316420]
      %v879 = vld.sshfl [vmem:[#allocation1 + $0x10] sm:$0xff pattern:$0x75316420]
      %880 = vrot.lane.b32.xlu0 %v877, 108
      %v881 = vpop.permute.xlu0 %880
      %882 = vrot.lane.b32.xlu0 %v878, 108
      %v883 = vpop.permute.xlu0 %882
      %884 = vrot.lane.b32.xlu0 %v879, 108
      %v885 = vpop.permute.xlu0 %884
      %v886 = vsel %vm545, %v881, %v883
      %v887 = vsel %vm545, %v883, %v885
      %891 = vst [vmem:[#allocation5 + $0x30] sm:$0xf0] %v886
      %892 = vst [vmem:[#allocation5 + $0x38] sm:$0xf0] %v887
      %893 = vst.msk [vmem:[#allocation5 + $0x40] sm:$0xf0] %vm794, %v885
      %v894 = vld [vmem:[#allocation3] sm:$0xff]
      %v895 = vld [vmem:[#allocation3 + $0x8] sm:$0xf]
      %898 = vst [vmem:[#allocation1] ss:$2 sm:$0xff] %v894
      %s899 = scalar_lea.vmem [#allocation1], 16
      %900 = vst [vmem:[%s899] ss:$2 sm:$0xff] %v895
      %v901 = vld.sshfl [vmem:[#allocation1] sm:$0xff pattern:$0x75316420]
      %v902 = vld.sshfl [vmem:[#allocation1 + $0x8] sm:$0xff pattern:$0x75316420]
      %v903 = vld.sshfl [vmem:[#allocation1 + $0x10] sm:$0xff pattern:$0x75316420]
      %904 = vrot.lane.b32.xlu0 %v901, 92
      %v905 = vpop.permute.xlu0 %904
      %906 = vrot.lane.b32.xlu0 %v902, 92
      %v907 = vpop.permute.xlu0 %906
      %908 = vrot.lane.b32.xlu0 %v903, 92
      %v909 = vpop.permute.xlu0 %908
      %v910 = vsel %vm566, %v905, %v907
      %v911 = vsel %vm566, %v907, %v909
      %915 = vst [vmem:[#allocation5 + $0x48] sm:$0xf] %v910
      %916 = vst [vmem:[#allocation5 + $0x50] sm:$0xf] %v911
      %917 = vst.msk [vmem:[#allocation5 + $0x58] sm:$0xf] %vm768, %v909
      %v918 = vld [vmem:[#allocation3] sm:$0xff]
      %v919 = vld [vmem:[#allocation3 + $0x8] sm:$0xf]
      %s922 = scalar_lea.vmem [#allocation1], 1
      %923 = vst [vmem:[%s922] ss:$2 sm:$0xff] %v918
      %s924 = scalar_lea.vmem [#allocation1], 17
      %925 = vst [vmem:[%s924] ss:$2 sm:$0xff] %v919
      %v926 = vld.sshfl [vmem:[#allocation1] sm:$0xff pattern:$0x75316420]
      %v927 = vld.sshfl [vmem:[#allocation1 + $0x8] sm:$0xff pattern:$0x75316420]
      %v928 = vld.sshfl [vmem:[#allocation1 + $0x10] sm:$0xff pattern:$0x75316420]
      %929 = vrot.lane.b32.xlu0 %v926, 91
      %v930 = vpop.permute.xlu0 %929
      %931 = vrot.lane.b32.xlu0 %v927, 91
      %v932 = vpop.permute.xlu0 %931
      %933 = vrot.lane.b32.xlu0 %v928, 91
      %v934 = vpop.permute.xlu0 %933
      %v935 = vsel %vm587, %v930, %v932
      %v936 = vsel %vm587, %v932, %v934
      %940 = vst [vmem:[#allocation5 + $0x48] sm:$0xf0] %v935
      %941 = vst [vmem:[#allocation5 + $0x50] sm:$0xf0] %v936
      %942 = vst.msk [vmem:[#allocation5 + $0x58] sm:$0xf0] %vm794, %v934
      %v943 = vld [vmem:[#allocation3] sm:$0xff]
      %v944 = vld [vmem:[#allocation3 + $0x8] sm:$0xf]
      %947 = vst [vmem:[#allocation1] ss:$2 sm:$0xff] %v943
      %s948 = scalar_lea.vmem [#allocation1], 16
      %949 = vst [vmem:[%s948] ss:$2 sm:$0xff] %v944
      %v950 = vld.sshfl [vmem:[#allocation1] sm:$0xff pattern:$0x75316420]
      %v951 = vld.sshfl [vmem:[#allocation1 + $0x8] sm:$0xff pattern:$0x75316420]
      %v952 = vld.sshfl [vmem:[#allocation1 + $0x10] sm:$0xff pattern:$0x75316420]
      %953 = vrot.lane.b32.xlu0 %v950, 90
      %v954 = vpop.permute.xlu0 %953
      %955 = vrot.lane.b32.xlu0 %v951, 90
      %v956 = vpop.permute.xlu0 %955
      %957 = vrot.lane.b32.xlu0 %v952, 90
      %v958 = vpop.permute.xlu0 %957
      %v959 = vsel %vm608, %v954, %v956
      %v960 = vsel %vm608, %v956, %v958
      %964 = vst [vmem:[#allocation5 + $0x60] sm:$0xf] %v959
      %965 = vst [vmem:[#allocation5 + $0x68] sm:$0xf] %v960
      %966 = vst.msk [vmem:[#allocation5 + $0x70] sm:$0xf] %vm768, %v958
      %v967 = vld [vmem:[%s6] sm:$0xf]
      %v968 = vld [vmem:[#allocation5] sm:$0xff]
      %v969 = vld [vmem:[#allocation5 + $0x8] sm:$0xff]
      %v970 = vld [vmem:[#allocation5 + $0x10] sm:$0xff]
      %v971 = vld [vmem:[#allocation5 + $0x18] sm:$0xff]
      %v972 = vld [vmem:[#allocation5 + $0x20] sm:$0xff]
      %v973 = vld [vmem:[#allocation5 + $0x28] sm:$0xff]
      %v974 = vld [vmem:[#allocation5 + $0x30] sm:$0xff]
      %v975 = vld [vmem:[#allocation5 + $0x38] sm:$0xff]
      %v976 = vld [vmem:[#allocation5 + $0x40] sm:$0xff]
      %v977 = vld [vmem:[#allocation5 + $0x48] sm:$0xff]
      %v978 = vld [vmem:[#allocation5 + $0x50] sm:$0xff]
      %v979 = vld [vmem:[#allocation5 + $0x58] sm:$0xff]
      %v980 = vld [vmem:[#allocation5 + $0x60] sm:$0xf]
      %v981 = vld [vmem:[#allocation5 + $0x68] sm:$0xf]
      %v982 = vld [vmem:[#allocation5 + $0x70] sm:$0xf]
      %v983 = vld [vmem:[%s7] sm:$0xf]
      %985 = vset.pattern.permute.xlu0 0
      %986 = vperm.xlu0 %985, %v983
      %v987 = vpop.permute.xlu0 %986
      %vm989 = vcmask 293888
      %v991 = vsel %vm989, %v967, 0
      %v994 = vsel %vm735, %v980, 0
      %v997 = vsel %vm735, %v981, 0
      %v1000 = vsel %vm735, %v982, 0
      %1002 = vmatpush.msra.mxu0 0.0
      %1003 = vmatpush.msra.mxu0 0.0
      %1004 = vmatpush.msra.mxu0 0.0
      %1005 = vmatpush.msra.mxu0 0.0
      %1006 = vmatpush.msra.mxu0 0.0
      %1007 = vmatpush.msra.mxu0 0.0
      %1008 = vmatpush.msra.mxu0 0.0
      %1009 = vmatpush.msra.mxu0 0.0
      %1010 = vmatpush.msra.mxu0 0.0
      %1011 = vmatpush.msra.mxu0 0.0
      %1012 = vmatpush.msra.mxu0 0.0
      %1013 = vmatpush.msra.mxu0 %v994
      %1014 = vmatpush.msra.mxu0 %v977
      %1015 = vmatpush.msra.mxu0 %v974
      %1016 = vmatpush.msra.mxu0 %v971
      %1017 = vmatpush.msra.mxu0 %v968
      %1018 = vmatmul.f32.gmra.mxu0 %v991
      %v1019 = vpop.f32.mrf.mxu0
      %v1020 = vadd.f32 %v987, %v1019
      %1021 = vdwg.mxu0
      %1022 = vmatpush.msra.mxu0 0.0
      %1023 = vmatpush.msra.mxu0 0.0
      %1024 = vmatpush.msra.mxu0 0.0
      %1025 = vmatpush.msra.mxu0 0.0
      %1026 = vmatpush.msra.mxu0 0.0
      %1027 = vmatpush.msra.mxu0 0.0
      %1028 = vmatpush.msra.mxu0 0.0
      %1029 = vmatpush.msra.mxu0 0.0
      %1030 = vmatpush.msra.mxu0 0.0
      %1031 = vmatpush.msra.mxu0 0.0
      %1032 = vmatpush.msra.mxu0 0.0
      %1033 = vmatpush.msra.mxu0 %v997
      %1034 = vmatpush.msra.mxu0 %v978
      %1035 = vmatpush.msra.mxu0 %v975
      %1036 = vmatpush.msra.mxu0 %v972
      %1037 = vmatpush.msra.mxu0 %v969
      %1038 = vmatmul.f32.gmra.mxu0 %v991
      %v1039 = vpop.f32.mrf.mxu0
      %v1040 = vadd.f32 %v987, %v1039
      %1041 = vdwg.mxu0
      %1042 = vmatpush.msra.mxu0 0.0
      %1043 = vmatpush.msra.mxu0 0.0
      %1044 = vmatpush.msra.mxu0 0.0
      %1045 = vmatpush.msra.mxu0 0.0
      %1046 = vmatpush.msra.mxu0 0.0
      %1047 = vmatpush.msra.mxu0 0.0
      %1048 = vmatpush.msra.mxu0 0.0
      %1049 = vmatpush.msra.mxu0 0.0
      %1050 = vmatpush.msra.mxu0 0.0
      %1051 = vmatpush.msra.mxu0 0.0
      %1052 = vmatpush.msra.mxu0 0.0
      %1053 = vmatpush.msra.mxu0 %v1000
      %1054 = vmatpush.msra.mxu0 %v979
      %1055 = vmatpush.msra.mxu0 %v976
      %1056 = vmatpush.msra.mxu0 %v973
      %1057 = vmatpush.msra.mxu0 %v970
      %1058 = vmatmul.f32.gmra.mxu0 %v991
      %v1059 = vpop.f32.mrf.mxu0
      %v1060 = vadd.f32 %v987, %v1059
      %1061 = vdwg.mxu0
      %v1062 = vmax.f32 %v1020, 0.0
      %v1063 = vmax.f32 %v1040, 0.0
      %v1064 = vmax.f32 %v1060, 0.0
      %v1067 = vrot.slane %v1063, 4
      %v1068 = vsel %vm735, %v1062, %v1067
      %1070 = vst [vmem:[%s322] sm:$0xff] %v1068
      %1071 = vst.msk [vmem:[%s322 + $0x8] sm:$0xf] %vm768, %v1064
      %p1072 = scmp.lt.s32.totalorder %s19, 1
      %s1073 = scalar_select %p1072, %s19, 1
      %s1074 = smul.addr %s1073, 3
      %s1075 = smul.addr %s1074, 4
      %s1076 = scalar_lea.vmem %s8, %s1075
      // Predicated region
      $region53: #{up_forward.1} parent=51 // pred_check
        %p1077 = pneg %p215
      $region54: #{up_forward.1} parent=51 // pred_check_branch
        %1079 = sbr.rel (%p1077) target = $region56
      $region55: #{up_forward.1} parent=51 // pred_region
        _
      $region56: #{up_forward.1} parent=51 // pred_fallthru
        _
    $region52: #{up_forward.1} parent=5 // pred_fallthru
      _
    %p1080 = scmp.le.s32.totalorder 2, %s14
    // Predicated region
    $region57: #{up_forward.1} parent=5 // pred_check
      %p1081 = pneg %p1080
    $region58: #{up_forward.1} parent=5 // pred_check_branch
      %1083 = sbr.rel (%p1081) target = $region60
    $region59: #{up_forward.1} parent=5 // pred_region
      %s1084 = ssub.s32 %s14, 2
      // Predicated region
      $region61: #{up_forward.1} parent=59 // pred_check
        %p1085 = pneg %p221
      $region62: #{up_forward.1} parent=59 // pred_check_branch
        %1087 = sbr.rel (%p1085) target = $region64
      $region63: #{up_forward.1} parent=59 // pred_region
        %p1088 = scmp.lt.s32.totalorder %s20, 1
        %s1089 = scalar_select %p1088, %s20, 1
        %s1090 = smul.addr %s1089, 3
        %s1091 = smul.addr %s1090, 4
        %s1092 = scalar_lea.vmem %s8, %s1091
      $region64: #{up_forward.1} parent=59 // pred_fallthru
        _
    $region60: #{up_forward.1} parent=5 // pred_fallthru
      _
  $region6: #{up_forward.1} parent=0 // loop_footer
    %s18 = sadd.s32 1, %s14
  $region7: #{up_forward.1} parent=0 // loop_footer_branch
    %13 = sbr.rel target = $region3
  $region8: #{up_forward.1} parent=0 // loop_exit
    _

</llo_original>
